<compile_context>
chip_gen: v5e
topology: v5e:2x2
jax: 0.10.0
libtpu: 0.0.40
codegen_flags: <defaults>
</compile_context>

<pallas_src>
import functools
import math

import jax
import jax.numpy as jnp
from jax.experimental import pallas as pl
from jax.experimental.pallas import tpu as pltpu


_LANE = 128
_BASE_BLOCK_ELEMS = 512 * 1024          # ~2 MiB f32 per in/out block (v5e/v6e)
_BASE_VMEM_LIMIT = 32 * 1024 * 1024
_BIG_BLOCK_ELEMS = 1024 * 1024          # ~4 MiB f32 per block (v7x-class, 3.2 TB/s HBM)
_BIG_VMEM_LIMIT = 40 * 1024 * 1024      # < 64 MiB physical on v7x, fine everywhere
_MIN_GRID_STEPS = 8                     # even, >= 8: keeps both v7x TCs busy
_MAX_FOLD_LANES = 512                   # cap F for the folded (H < 128) path


def _cdiv(a, b):
    return -(-a // b)


def _round_up(x, m):
    return _cdiv(x, m) * m


def _sublane_multiple(dtype):
    # f32 -> 8 rows per vreg tile, bf16 -> 16, int8/fp8 -> 32.
    return max(8, 32 // jnp.dtype(dtype).itemsize)


def _chip_block_config():
    """(max_block_elems, vmem_limit_bytes) picked from the chip's VMEM capacity.

    v7x-class parts (64 MiB VMEM, ~3.2 TB/s HBM) want ~4 MiB blocks so the
    ~0.35 us per-grid-step overhead stays <10%; v5e/v6e are already ~90%
    amortized at 2 MiB. Both configs are correct on every chip, so a failed
    query simply falls back to the conservative one.
    """
    vmem_bytes = 128 * 1024 * 1024
    try:
        info = pltpu.get_tpu_info()
        vmem_bytes = int(getattr(info, "vmem_capacity_bytes", vmem_bytes))
    except Exception:
        pass
    if vmem_bytes <= 64 * 1024 * 1024:
        return _BIG_BLOCK_ELEMS, _BIG_VMEM_LIMIT
    return _BASE_BLOCK_ELEMS, _BASE_VMEM_LIMIT


def _ln_kernel_wide(x_ref, g_ref, b_ref, o_ref, *, eps):
    """LayerNorm over the full last axis of the block (H >= 128 path)."""
    x = x_ref[...].astype(jnp.float32)
    u = jnp.mean(x, axis=-1, keepdims=True)
    d = x - u
    s = jnp.mean(d * d, axis=-1, keepdims=True)          # biased variance
    y = d * jax.lax.rsqrt(s + eps)                        # eps inside sqrt (TF style)
    o_ref[...] = (g_ref[...] * y + b_ref[...]).astype(o_ref.dtype)


def _ln_kernel_folded(x_ref, g_ref, b_ref, m_ref, o_ref, *, eps, f):
    """LayerNorm where each lane row holds `fold` independent rows of width H.

    m_ref is the (2F, 2F) block-diagonal matrix diag(m, m) where m is the
    (F, F) segment-mean matrix (1/H inside each HxH diagonal block).  One
    fused MXU matmul of concat([x, x*x]) against it yields the per-segment
    E[x] (first F lanes) and E[x^2] (last F lanes); variance = E[x^2] - E[x]^2.
    """
    x = x_ref[...].astype(jnp.float32)
    xx = jnp.concatenate([x, x * x], axis=-1)             # (rt, 2F), lane-tile aligned
    r = jnp.dot(xx, m_ref[...], preferred_element_type=jnp.float32,
                precision=jax.lax.Precision.HIGHEST)      # f32-accurate multi-pass
    u = r[:, :f]
    s = jnp.maximum(r[:, f:] - u * u, 0.0)                # clamp tiny negative rounding
    y = (x - u) * jax.lax.rsqrt(s + eps)
    o_ref[...] = (g_ref[...] * y + b_ref[...]).astype(o_ref.dtype)


def bert_layer_norm(x, gamma, beta, eps=1e-12):
    """x: (..., H).  gamma, beta: (H,).  Returns the same shape/dtype as x."""
    orig_shape = x.shape
    H = orig_shape[-1]
    rows = int(math.prod(orig_shape[:-1]))
    x2 = x.reshape(rows, H)
    sub = _sublane_multiple(x.dtype)
    max_block_elems, vmem_limit = _chip_block_config()

    # Lane-dense folding for small hidden sizes: fold rows so F = fold*H is a
    # multiple of 128 lanes (unmasked full-width vst), for any H < 128 whose
    # fold stays reasonably small.
    fold = 1
    if H < _LANE:
        f_try = _LANE // math.gcd(H, _LANE)               # smallest fold: fold*H % 128 == 0
        if f_try * H <= _MAX_FOLD_LANES:
            fold = f_try
    F = fold * H

    # gamma/beta: cast to f32 once here (outside the grid), tiled per segment.
    gamma_f = jnp.tile(gamma.astype(jnp.float32).reshape(1, H), (1, fold))
    beta_f = jnp.tile(beta.astype(jnp.float32).reshape(1, H), (1, fold))

    # Tiny pad only up to a multiple of `fold` (needed for the fold reshape).
    # Raggedness vs. the row tile is handled by Pallas' masked last block.
    rows_f = rows
    if fold > 1 and rows % fold:
        rows_f = _round_up(rows, fold)
        x2 = jnp.pad(x2, ((0, rows_f - rows), (0, 0)))
    kernel_rows = rows_f // fold
    xf = x2.reshape(kernel_rows, F)

    # --- tile selection -----------------------------------------------------
    # Folded path carries ~2x-wider temporaries (concat + matmul result), so
    # keep its blocks at the base size; the wide path streams at the chip size.
    block_elems = max_block_elems if fold == 1 else min(max_block_elems, _BASE_BLOCK_ELEMS)
    max_tile = max(sub, (block_elems // F) // sub * sub)
    if kernel_rows <= sub:
        row_tile = kernel_rows                            # one block, full sublane extent
    else:
        # Aim for >= _MIN_GRID_STEPS grid steps (v7x megacore sharding), capped
        # by the per-block VMEM budget; ragged last block is masked by Pallas.
        row_tile = min(max_tile,
                       max(sub, _round_up(_cdiv(kernel_rows, _MIN_GRID_STEPS), sub)))
    grid = (_cdiv(kernel_rows, row_tile),)

    x_spec = pl.BlockSpec((row_tile, F), lambda i: (i, 0))
    gb_spec = pl.BlockSpec((1, F), lambda i: (0, 0))
    out_spec = pl.BlockSpec((row_tile, F), lambda i: (i, 0))

    if fold > 1:
        seg = jnp.arange(F, dtype=jnp.int32) // H
        m = (seg[:, None] == seg[None, :]).astype(jnp.float32) / float(H)
        z = jnp.zeros((F, F), jnp.float32)
        m2 = jnp.concatenate(
            [jnp.concatenate([m, z], axis=1),
             jnp.concatenate([z, m], axis=1)], axis=0)    # (2F, 2F): diag(m, m)
        kernel = functools.partial(_ln_kernel_folded, eps=eps, f=F)
        in_specs = [x_spec, gb_spec, gb_spec,
                    pl.BlockSpec((2 * F, 2 * F), lambda i: (0, 0))]
        args = (xf, gamma_f, beta_f, m2)
    else:
        kernel = functools.partial(_ln_kernel_wide, eps=eps)
        in_specs = [x_spec, gb_spec, gb_spec]
        args = (xf, gamma_f, beta_f)

    out = pl.pallas_call(
        kernel,
        out_shape=jax.ShapeDtypeStruct((kernel_rows, F), x.dtype),
        grid_spec=pl.GridSpec(grid=grid, in_specs=in_specs, out_specs=out_spec),
        compiler_params=pltpu.CompilerParams(
            dimension_semantics=("parallel",),
            vmem_limit_bytes=vmem_limit,
        ),
    )(*args)

    out = out.reshape(rows_f, H)
    if rows_f != rows:
        out = out[:rows]
    return out.reshape(orig_shape)


def bert_layer_norm_ref(x, gamma, beta, eps=1e-12):
    xf = x.astype(jnp.float32)
    u = jnp.mean(xf, axis=-1, keepdims=True)
    s = jnp.mean((xf - u) ** 2, axis=-1, keepdims=True)
    y = (xf - u) / jnp.sqrt(s + eps)
    return (gamma.astype(jnp.float32) * y + beta.astype(jnp.float32)).astype(x.dtype)


if __name__ == "__main__":
    key = jax.random.PRNGKey(0)

    # Shapes implied by the module's forward: (batch, seq, hidden) with
    # layernorm over hidden.  Parameters match nn.Parameter(ones/zeros(H)).
    B, S, H = 2, 8, 32
    x = jax.random.normal(key, (B, S, H), dtype=jnp.float32)
    gamma = jnp.ones((H,), dtype=jnp.float32)
    beta = jnp.zeros((H,), dtype=jnp.float32)

    out = jax.block_until_ready(bert_layer_norm(x, gamma, beta))
    ref = bert_layer_norm_ref(x, gamma, beta)
    assert out.shape == x.shape and out.dtype == x.dtype
    assert jnp.allclose(out, ref, atol=1e-5, rtol=1e-5)

    # H >= 128 (wide, non-folded) path, dividing tiles.
    H2 = 128
    g2 = jnp.ones((H2,), jnp.float32)
    b2 = jnp.zeros((H2,), jnp.float32)
    x2 = jax.random.normal(key, (2, 8, H2), dtype=jnp.float32)
    out2 = jax.block_until_ready(bert_layer_norm(x2, g2, b2))
    assert jnp.allclose(out2, bert_layer_norm_ref(x2, g2, b2), atol=1e-5, rtol=1e-5)

    # Wide path with a ragged row count (masked last block, no pad/slice).
    x3 = jax.random.normal(key, (2, 9, H2), dtype=jnp.float32)
    out3 = jax.block_until_ready(bert_layer_norm(x3, g2, b2))
    assert jnp.allclose(out3, bert_layer_norm_ref(x3, g2, b2), atol=1e-5, rtol=1e-5)

    # Folded path with rows not a multiple of fold (tiny fold-pad path).
    x4 = jax.random.normal(key, (3, 5, H), dtype=jnp.float32)
    out4 = jax.block_until_ready(bert_layer_norm(x4, gamma, beta))
    assert jnp.allclose(out4, bert_layer_norm_ref(x4, gamma, beta), atol=1e-5, rtol=1e-5)

    print("KERNEL_OK")
</pallas_src>

<mosaic_0001>
module attributes {stable_mosaic.version = 11 : i64} {
  func.func @_ln_kernel_folded(%arg0: i32, %arg1: memref<4x128xf32, #tpu.memory_space<vmem>>, %arg2: memref<1x128xf32, #tpu.memory_space<vmem>>, %arg3: memref<1x128xf32, #tpu.memory_space<vmem>>, %arg4: memref<256x256xf32, #tpu.memory_space<vmem>>, %arg5: memref<4x128xf32, #tpu.memory_space<vmem>>) attributes {dimension_semantics = [#tpu.dimension_semantics<parallel>], iteration_bounds = array<i64: 1>, scalar_prefetch = 0 : i64, scratch_operands = 0 : i64, tpu.core_type = #tpu.core_type<tc>, window_params = [{transform_indices = @transform_0, window_bounds = array<i64: 4, 128>}, {pipeline_mode = #tpu.pipeline_mode<synchronous>, transform_indices = @transform_1, window_bounds = array<i64: 1, 128>}, {pipeline_mode = #tpu.pipeline_mode<synchronous>, transform_indices = @transform_2, window_bounds = array<i64: 1, 128>}, {pipeline_mode = #tpu.pipeline_mode<synchronous>, transform_indices = @transform_3, window_bounds = array<i64: 256, 256>}, {transform_indices = @transform_4, window_bounds = array<i64: 4, 128>}]} {
    %c0 = arith.constant 0 : index
    %c0_0 = arith.constant 0 : index
    %0 = vector.load %arg1[%c0, %c0_0] : memref<4x128xf32, #tpu.memory_space<vmem>>, vector<4x128xf32>
    %1 = arith.mulf %0, %0 : vector<4x128xf32>
    %2 = tpu.concatenate %0, %1 in 1 : vector<4x128xf32>, vector<4x128xf32> -> vector<4x256xf32>
    %c0_1 = arith.constant 0 : index
    %c0_2 = arith.constant 0 : index
    %3 = vector.load %arg4[%c0_1, %c0_2] : memref<256x256xf32, #tpu.memory_space<vmem>>, vector<256x256xf32>
    %cst = arith.constant dense<0.000000e+00> : vector<4x256xf32>
    %4 = tpu.matmul %2, %3, %cst {dimension_numbers = #tpu.dot_dimension_numbers<[1], [0], [0], [1], [0, 0, 1, 1], [], []>, precision = #tpu.contract_precision<fp32>} : vector<4x256xf32>, vector<256x256xf32>, vector<4x256xf32> -> vector<4x256xf32>
    %5 = vector.extract_strided_slice %4 {offsets = [0, 0], sizes = [4, 128], strides = [1, 1]} : vector<4x256xf32> to vector<4x128xf32>
    %6 = vector.extract_strided_slice %4 {offsets = [0, 128], sizes = [4, 128], strides = [1, 1]} : vector<4x256xf32> to vector<4x128xf32>
    %7 = arith.mulf %5, %5 : vector<4x128xf32>
    %8 = arith.subf %6, %7 : vector<4x128xf32>
    %cst_3 = arith.constant 0.000000e+00 : f32
    %9 = vector.broadcast %cst_3 : f32 to vector<4x128xf32>
    %10 = arith.maximumf %8, %9 : vector<4x128xf32>
    %11 = arith.subf %0, %5 : vector<4x128xf32>
    %cst_4 = arith.constant 9.99999996E-13 : f32
    %12 = vector.broadcast %cst_4 : f32 to vector<4x128xf32>
    %13 = arith.addf %10, %12 : vector<4x128xf32>
    %14 = math.rsqrt %13 : vector<4x128xf32>
    %15 = arith.mulf %11, %14 : vector<4x128xf32>
    %c0_5 = arith.constant 0 : index
    %c0_6 = arith.constant 0 : index
    %16 = vector.load %arg2[%c0_5, %c0_6] : memref<1x128xf32, #tpu.memory_space<vmem>>, vector<1x128xf32>
    %17 = vector.broadcast %16 : vector<1x128xf32> to vector<4x128xf32>
    %18 = arith.mulf %17, %15 : vector<4x128xf32>
    %c0_7 = arith.constant 0 : index
    %c0_8 = arith.constant 0 : index
    %19 = vector.load %arg3[%c0_7, %c0_8] : memref<1x128xf32, #tpu.memory_space<vmem>>, vector<1x128xf32>
    %20 = vector.broadcast %19 : vector<1x128xf32> to vector<4x128xf32>
    %21 = arith.addf %18, %20 : vector<4x128xf32>
    %c0_9 = arith.constant 0 : index
    %c0_10 = arith.constant 0 : index
    %22 = vector.load %arg5[%c0_9, %c0_10] : memref<4x128xf32, #tpu.memory_space<vmem>>, vector<4x128xf32>
    tpu.vector_store %arg5[%c0_9, %c0_10], %21 {strides = array<i32>} : memref<4x128xf32, #tpu.memory_space<vmem>>, vector<4x128xf32>,
    return
  }
  func.func @transform_0(%arg0: i32) -> (i32, i32) {
    %c0_i32 = arith.constant 0 : i32
    %c0_i32_0 = arith.constant 0 : i32
    return %arg0, %c0_i32 : i32, i32
  }
  func.func @transform_1(%arg0: i32) -> (i32, i32) {
    %c0_i32 = arith.constant 0 : i32
    %c0_i32_0 = arith.constant 0 : i32
    %c0_i32_1 = arith.constant 0 : i32
    return %c0_i32, %c0_i32_0 : i32, i32
  }
  func.func @transform_2(%arg0: i32) -> (i32, i32) {
    %c0_i32 = arith.constant 0 : i32
    %c0_i32_0 = arith.constant 0 : i32
    %c0_i32_1 = arith.constant 0 : i32
    return %c0_i32, %c0_i32_0 : i32, i32
  }
  func.func @transform_3(%arg0: i32) -> (i32, i32) {
    %c0_i32 = arith.constant 0 : i32
    %c0_i32_0 = arith.constant 0 : i32
    %c0_i32_1 = arith.constant 0 : i32
    return %c0_i32, %c0_i32_0 : i32, i32
  }
  func.func @transform_4(%arg0: i32) -> (i32, i32) {
    %c0_i32 = arith.constant 0 : i32
    %c0_i32_0 = arith.constant 0 : i32
    return %arg0, %c0_i32 : i32, i32
  }
}

</mosaic_0001>

<llo_original>
// kernel: tpu_custom_call.1
$region0: #{tpu_custom_call.1}
  #allocation0 [shape = 'u32[]', space=smem, size = 0x4, offset = 0x4, fixed_abs, tag = 'smem constant byte address 0x4 - core index']
  #allocation1 [shape = 'u32[72,128]{1,0:T(1,128)}', space=vmem, size = 0x9000, scoped, tag = 'internal scratch']
  %s0 = inlined_call_operand.hbm [shape: f32[4,128], index: 0, kind: input, shape index: {}]
  %s1 = inlined_call_operand.hbm [shape: f32[1,128], index: 1, kind: input, shape index: {}]
  %s2 = inlined_call_operand.vmem [shape: f32[1,128], index: 2, kind: input, shape index: {}]
  %s3 = inlined_call_operand.hbm [shape: f32[256,256], index: 3, kind: input, shape index: {}]
  %s4 = inlined_call_operand.hbm [shape: f32[4,128], index: 4, kind: output, shape index: {}]
  %s5 = sld [smem:[#allocation0]]
  $region38: #{tpu_custom_call.1} parent=0
    _
  %s7 = ssub.s32 1, %s5
  %s8 = scalar_select 0, %s7, %s5
  $region1: #{tpu_custom_call.1} parent=0
    #allocation2 [shape = 'u8[2048]{0}', space=vmem, size = 0x800, scoped, tag = 'input window, operand 0, single buffered']
    #allocation3 [shape = 's32[1]{0}', space=sflag, size = 0x4, scoped, tag = 'scoped memory for tpu_custom_call.1']
    #allocation4 [shape = 's32[1]{0}', space=sflag, size = 0x4, scoped, tag = 'scoped memory for tpu_custom_call.1']
    #allocation5 [shape = 'u8[512]{0}', space=vmem, size = 0x400, scoped, tag = 'input window, operand 1, single buffered']
    #allocation6 [shape = 's32[1]{0}', space=sflag, size = 0x4, scoped, tag = 'scoped memory for tpu_custom_call.1']
    #allocation7 [shape = 'u8[262144]{0}', space=vmem, size = 0x40000, scoped, tag = 'input window, operand 3, single buffered']
    #allocation8 [shape = 'u8[2048]{0}', space=vmem, size = 0x800, scoped, tag = 'output window, operand 0, single buffered']
    %9 = vsyncpa [#allocation3], 0
    %10 = vsyncpa [#allocation6], 0
    %11 = vsyncpa [#allocation4], 0
    // Predicated region
    $region2: #{tpu_custom_call.1} parent=1 // pred_check
      _
    $region3: #{tpu_custom_call.1} parent=1 // pred_check_branch
      %13 = sbr.rel (0) target = $region5
    $region4: #{tpu_custom_call.1} parent=1 // pred_region
      %15 = vsyncadd [#allocation3], 0
      %s17 = sshll.u32 %s0, 4
      %s18 = int_to_ptr.hbm [resolvable:$true] %s17
      %s19 = sshll.u32 [#allocation2], 4
      %s20 = int_to_ptr.vmem [resolvable:$true] %s19
      %22 = dma.hbm_to_vmem [thread:$0]  %s18, 64, %s20, [#allocation3]
    $region5: #{tpu_custom_call.1} parent=1 // pred_fallthru
      _
    // Predicated region
    $region6: #{tpu_custom_call.1} parent=1 // pred_check
      _
    $region7: #{tpu_custom_call.1} parent=1 // pred_check_branch
      %24 = sbr.rel (0) target = $region9
    $region8: #{tpu_custom_call.1} parent=1 // pred_region
      %26 = vsyncadd [#allocation6], 0
      %s28 = sshll.u32 %s1, 4
      %s29 = int_to_ptr.hbm [resolvable:$true] %s28
      %s30 = sshll.u32 [#allocation5], 4
      %s31 = int_to_ptr.vmem [resolvable:$true] %s30
      %33 = dma.hbm_to_vmem [thread:$0]  %s29, 16, %s31, [#allocation6]
    $region9: #{tpu_custom_call.1} parent=1 // pred_fallthru
      _
    // Predicated region
    $region10: #{tpu_custom_call.1} parent=1 // pred_check
      _
    $region11: #{tpu_custom_call.1} parent=1 // pred_check_branch
      %35 = sbr.rel (0) target = $region13
    $region12: #{tpu_custom_call.1} parent=1 // pred_region
      _
    $region13: #{tpu_custom_call.1} parent=1 // pred_fallthru
      _
    // Predicated region
    $region14: #{tpu_custom_call.1} parent=1 // pred_check
      _
    $region15: #{tpu_custom_call.1} parent=1 // pred_check_branch
      %37 = sbr.rel (0) target = $region17
    $region16: #{tpu_custom_call.1} parent=1 // pred_region
      %39 = vsyncadd [#allocation6], 0
      %s40 = sshll.u32 %s3, 4
      %s41 = int_to_ptr.hbm [resolvable:$true] %s40
      %s42 = sshll.u32 [#allocation7], 4
      %s43 = int_to_ptr.vmem [resolvable:$true] %s42
      %48 = dma.hbm_to_vmem [thread:$0]  %s41, 8192, %s43, [#allocation6], 256, 256, 16
    $region17: #{tpu_custom_call.1} parent=1 // pred_fallthru
      _
    // Predicated region
    $region18: #{tpu_custom_call.1} parent=1 // pred_check
      _
    $region19: #{tpu_custom_call.1} parent=1 // pred_check_branch
      %50 = sbr.rel (0) target = $region21
    $region20: #{tpu_custom_call.1} parent=1 // pred_region
      %52 = dma.done [#allocation3], 64
    $region21: #{tpu_custom_call.1} parent=1 // pred_fallthru
      _
    // Predicated region
    $region22: #{tpu_custom_call.1} parent=1 // pred_check
      _
    $region23: #{tpu_custom_call.1} parent=1 // pred_check_branch
      %54 = sbr.rel (0) target = $region25
    $region24: #{tpu_custom_call.1} parent=1 // pred_region
      %56 = dma.done [#allocation6], 16
    $region25: #{tpu_custom_call.1} parent=1 // pred_fallthru
      _
    // Predicated region
    $region26: #{tpu_custom_call.1} parent=1 // pred_check
      _
    $region27: #{tpu_custom_call.1} parent=1 // pred_check_branch
      %58 = sbr.rel (0) target = $region29
    $region28: #{tpu_custom_call.1} parent=1 // pred_region
      %60 = dma.done [#allocation6], 8192
    $region29: #{tpu_custom_call.1} parent=1 // pred_fallthru
      _
    %v61 = vld [vmem:[#allocation2] sm:$0xf]
    %v62 = vmul.f32 %v61, %v61
    %v63 = vld [vmem:[#allocation7] sm:$0xff]
    %v64 = vld [vmem:[#allocation7 + $0x8] sm:$0xff]
    %v65 = vld [vmem:[#allocation7 + $0x10] sm:$0xff]
    %v66 = vld [vmem:[#allocation7 + $0x18] sm:$0xff]
    %v67 = vld [vmem:[#allocation7 + $0x20] sm:$0xff]
    %v68 = vld [vmem:[#allocation7 + $0x28] sm:$0xff]
    %v69 = vld [vmem:[#allocation7 + $0x30] sm:$0xff]
    %v70 = vld [vmem:[#allocation7 + $0x38] sm:$0xff]
    %v71 = vld [vmem:[#allocation7 + $0x40] sm:$0xff]
    %v72 = vld [vmem:[#allocation7 + $0x48] sm:$0xff]
    %v73 = vld [vmem:[#allocation7 + $0x50] sm:$0xff]
    %v74 = vld [vmem:[#allocation7 + $0x58] sm:$0xff]
    %v75 = vld [vmem:[#allocation7 + $0x60] sm:$0xff]
    %v76 = vld [vmem:[#allocation7 + $0x68] sm:$0xff]
    %v77 = vld [vmem:[#allocation7 + $0x70] sm:$0xff]
    %v78 = vld [vmem:[#allocation7 + $0x78] sm:$0xff]
    %v79 = vld [vmem:[#allocation7 + $0x80] sm:$0xff]
    %v80 = vld [vmem:[#allocation7 + $0x88] sm:$0xff]
    %v81 = vld [vmem:[#allocation7 + $0x90] sm:$0xff]
    %v82 = vld [vmem:[#allocation7 + $0x98] sm:$0xff]
    %v83 = vld [vmem:[#allocation7 + $0xa0] sm:$0xff]
    %v84 = vld [vmem:[#allocation7 + $0xa8] sm:$0xff]
    %v85 = vld [vmem:[#allocation7 + $0xb0] sm:$0xff]
    %v86 = vld [vmem:[#allocation7 + $0xb8] sm:$0xff]
    %v87 = vld [vmem:[#allocation7 + $0xc0] sm:$0xff]
    %v88 = vld [vmem:[#allocation7 + $0xc8] sm:$0xff]
    %v89 = vld [vmem:[#allocation7 + $0xd0] sm:$0xff]
    %v90 = vld [vmem:[#allocation7 + $0xd8] sm:$0xff]
    %v91 = vld [vmem:[#allocation7 + $0xe0] sm:$0xff]
    %v92 = vld [vmem:[#allocation7 + $0xe8] sm:$0xff]
    %v93 = vld [vmem:[#allocation7 + $0xf0] sm:$0xff]
    %v94 = vld [vmem:[#allocation7 + $0xf8] sm:$0xff]
    %v95 = vld [vmem:[#allocation7 + $0x100] sm:$0xff]
    %v96 = vld [vmem:[#allocation7 + $0x108] sm:$0xff]
    %v97 = vld [vmem:[#allocation7 + $0x110] sm:$0xff]
    %v98 = vld [vmem:[#allocation7 + $0x118] sm:$0xff]
    %v99 = vld [vmem:[#allocation7 + $0x120] sm:$0xff]
    %v100 = vld [vmem:[#allocation7 + $0x128] sm:$0xff]
    %v101 = vld [vmem:[#allocation7 + $0x130] sm:$0xff]
    %v102 = vld [vmem:[#allocation7 + $0x138] sm:$0xff]
    %v103 = vld [vmem:[#allocation7 + $0x140] sm:$0xff]
    %v104 = vld [vmem:[#allocation7 + $0x148] sm:$0xff]
    %v105 = vld [vmem:[#allocation7 + $0x150] sm:$0xff]
    %v106 = vld [vmem:[#allocation7 + $0x158] sm:$0xff]
    %v107 = vld [vmem:[#allocation7 + $0x160] sm:$0xff]
    %v108 = vld [vmem:[#allocation7 + $0x168] sm:$0xff]
    %v109 = vld [vmem:[#allocation7 + $0x170] sm:$0xff]
    %v110 = vld [vmem:[#allocation7 + $0x178] sm:$0xff]
    %v111 = vld [vmem:[#allocation7 + $0x180] sm:$0xff]
    %v112 = vld [vmem:[#allocation7 + $0x188] sm:$0xff]
    %v113 = vld [vmem:[#allocation7 + $0x190] sm:$0xff]
    %v114 = vld [vmem:[#allocation7 + $0x198] sm:$0xff]
    %v115 = vld [vmem:[#allocation7 + $0x1a0] sm:$0xff]
    %v116 = vld [vmem:[#allocation7 + $0x1a8] sm:$0xff]
    %v117 = vld [vmem:[#allocation7 + $0x1b0] sm:$0xff]
    %v118 = vld [vmem:[#allocation7 + $0x1b8] sm:$0xff]
    %v119 = vld [vmem:[#allocation7 + $0x1c0] sm:$0xff]
    %v120 = vld [vmem:[#allocation7 + $0x1c8] sm:$0xff]
    %v121 = vld [vmem:[#allocation7 + $0x1d0] sm:$0xff]
    %v122 = vld [vmem:[#allocation7 + $0x1d8] sm:$0xff]
    %v123 = vld [vmem:[#allocation7 + $0x1e0] sm:$0xff]
    %v124 = vld [vmem:[#allocation7 + $0x1e8] sm:$0xff]
    %v125 = vld [vmem:[#allocation7 + $0x1f0] sm:$0xff]
    %v126 = vld [vmem:[#allocation7 + $0x1f8] sm:$0xff]
    %v127 = vand.u32 %v93, 4294901760
    %128 = vmatpush.msra.mxu0 %v127
    %v129 = vand.u32 %v91, 4294901760
    %130 = vmatpush.msra.mxu0 %v129
    %v131 = vand.u32 %v89, 4294901760
    %132 = vmatpush.msra.mxu0 %v131
    %v133 = vand.u32 %v87, 4294901760
    %134 = vmatpush.msra.mxu0 %v133
    %v135 = vand.u32 %v85, 4294901760
    %136 = vmatpush.msra.mxu0 %v135
    %v137 = vand.u32 %v83, 4294901760
    %138 = vmatpush.msra.mxu0 %v137
    %v139 = vand.u32 %v81, 4294901760
    %140 = vmatpush.msra.mxu0 %v139
    %v141 = vand.u32 %v79, 4294901760
    %142 = vmatpush.msra.mxu0 %v141
    %v143 = vand.u32 %v77, 4294901760
    %144 = vmatpush.msra.mxu0 %v143
    %v145 = vand.u32 %v75, 4294901760
    %146 = vmatpush.msra.mxu0 %v145
    %v147 = vand.u32 %v73, 4294901760
    %148 = vmatpush.msra.mxu0 %v147
    %v149 = vand.u32 %v71, 4294901760
    %150 = vmatpush.msra.mxu0 %v149
    %v151 = vand.u32 %v69, 4294901760
    %152 = vmatpush.msra.mxu0 %v151
    %v153 = vand.u32 %v67, 4294901760
    %154 = vmatpush.msra.mxu0 %v153
    %v155 = vand.u32 %v65, 4294901760
    %156 = vmatpush.msra.mxu0 %v155
    %v157 = vand.u32 %v63, 4294901760
    %158 = vmatpush.msra.mxu0 %v157
    %v159 = vand.u32 %v61, 4294901760
    %v160 = vsub.f32 %v61, %v159
    %v161 = vand.u32 %v160, 4294901760
    %v162 = vsub.f32 %v160, %v161
    %v163 = vand.u32 %v162, 4294901760
    %164 = vmatmul.f32.gmra.mxu0 %v163
    %v165 = vpop.f32.mrf.mxu0
    %v166 = vadd.f32 0.0, %v165
    %167 = vdwg.mxu0
    %v168 = vand.u32 %v93, 4294901760
    %v169 = vsub.f32 %v93, %v168
    %v170 = vand.u32 %v169, 4294901760
    %v171 = vsub.f32 %v169, %v170
    %v172 = vand.u32 %v171, 4294901760
    %173 = vmatpush.msra.mxu0 %v172
    %v174 = vand.u32 %v91, 4294901760
    %v175 = vsub.f32 %v91, %v174
    %v176 = vand.u32 %v175, 4294901760
    %v177 = vsub.f32 %v175, %v176
    %v178 = vand.u32 %v177, 4294901760
    %179 = vmatpush.msra.mxu0 %v178
    %v180 = vand.u32 %v89, 4294901760
    %v181 = vsub.f32 %v89, %v180
    %v182 = vand.u32 %v181, 4294901760
    %v183 = vsub.f32 %v181, %v182
    %v184 = vand.u32 %v183, 4294901760
    %185 = vmatpush.msra.mxu0 %v184
    %v186 = vand.u32 %v87, 4294901760
    %v187 = vsub.f32 %v87, %v186
    %v188 = vand.u32 %v187, 4294901760
    %v189 = vsub.f32 %v187, %v188
    %v190 = vand.u32 %v189, 4294901760
    %191 = vmatpush.msra.mxu0 %v190
    %v192 = vand.u32 %v85, 4294901760
    %v193 = vsub.f32 %v85, %v192
    %v194 = vand.u32 %v193, 4294901760
    %v195 = vsub.f32 %v193, %v194
    %v196 = vand.u32 %v195, 4294901760
    %197 = vmatpush.msra.mxu0 %v196
    %v198 = vand.u32 %v83, 4294901760
    %v199 = vsub.f32 %v83, %v198
    %v200 = vand.u32 %v199, 4294901760
    %v201 = vsub.f32 %v199, %v200
    %v202 = vand.u32 %v201, 4294901760
    %203 = vmatpush.msra.mxu0 %v202
    %v204 = vand.u32 %v81, 4294901760
    %v205 = vsub.f32 %v81, %v204
    %v206 = vand.u32 %v205, 4294901760
    %v207 = vsub.f32 %v205, %v206
    %v208 = vand.u32 %v207, 4294901760
    %209 = vmatpush.msra.mxu0 %v208
    %v210 = vand.u32 %v79, 4294901760
    %v211 = vsub.f32 %v79, %v210
    %v212 = vand.u32 %v211, 4294901760
    %v213 = vsub.f32 %v211, %v212
    %v214 = vand.u32 %v213, 4294901760
    %215 = vmatpush.msra.mxu0 %v214
    %v216 = vand.u32 %v77, 4294901760
    %v217 = vsub.f32 %v77, %v216
    %v218 = vand.u32 %v217, 4294901760
    %v219 = vsub.f32 %v217, %v218
    %v220 = vand.u32 %v219, 4294901760
    %221 = vmatpush.msra.mxu0 %v220
    %v222 = vand.u32 %v75, 4294901760
    %v223 = vsub.f32 %v75, %v222
    %v224 = vand.u32 %v223, 4294901760
    %v225 = vsub.f32 %v223, %v224
    %v226 = vand.u32 %v225, 4294901760
    %227 = vmatpush.msra.mxu0 %v226
    %v228 = vand.u32 %v73, 4294901760
    %v229 = vsub.f32 %v73, %v228
    %v230 = vand.u32 %v229, 4294901760
    %v231 = vsub.f32 %v229, %v230
    %v232 = vand.u32 %v231, 4294901760
    %233 = vmatpush.msra.mxu0 %v232
    %v234 = vand.u32 %v71, 4294901760
    %v235 = vsub.f32 %v71, %v234
    %v236 = vand.u32 %v235, 4294901760
    %v237 = vsub.f32 %v235, %v236
    %v238 = vand.u32 %v237, 4294901760
    %239 = vmatpush.msra.mxu0 %v238
    %v240 = vand.u32 %v69, 4294901760
    %v241 = vsub.f32 %v69, %v240
    %v242 = vand.u32 %v241, 4294901760
    %v243 = vsub.f32 %v241, %v242
    %v244 = vand.u32 %v243, 4294901760
    %245 = vmatpush.msra.mxu0 %v244
    %v246 = vand.u32 %v67, 4294901760
    %v247 = vsub.f32 %v67, %v246
    %v248 = vand.u32 %v247, 4294901760
    %v249 = vsub.f32 %v247, %v248
    %v250 = vand.u32 %v249, 4294901760
    %251 = vmatpush.msra.mxu0 %v250
    %v252 = vand.u32 %v65, 4294901760
    %v253 = vsub.f32 %v65, %v252
    %v254 = vand.u32 %v253, 4294901760
    %v255 = vsub.f32 %v253, %v254
    %v256 = vand.u32 %v255, 4294901760
    %257 = vmatpush.msra.mxu0 %v256
    %v258 = vand.u32 %v63, 4294901760
    %v259 = vsub.f32 %v63, %v258
    %v260 = vand.u32 %v259, 4294901760
    %v261 = vsub.f32 %v259, %v260
    %v262 = vand.u32 %v261, 4294901760
    %263 = vmatpush.msra.mxu0 %v262
    %v264 = vand.u32 %v61, 4294901760
    %265 = vmatmul.f32.gmra.mxu0 %v264
    %v266 = vpop.f32.mrf.mxu0
    %v267 = vadd.f32 %v166, %v266
    %268 = vdwg.mxu0
    %v269 = vand.u32 %v93, 4294901760
    %v270 = vsub.f32 %v93, %v269
    %271 = vmatpush.msra.mxu0 %v270
    %v272 = vand.u32 %v91, 4294901760
    %v273 = vsub.f32 %v91, %v272
    %274 = vmatpush.msra.mxu0 %v273
    %v275 = vand.u32 %v89, 4294901760
    %v276 = vsub.f32 %v89, %v275
    %277 = vmatpush.msra.mxu0 %v276
    %v278 = vand.u32 %v87, 4294901760
    %v279 = vsub.f32 %v87, %v278
    %280 = vmatpush.msra.mxu0 %v279
    %v281 = vand.u32 %v85, 4294901760
    %v282 = vsub.f32 %v85, %v281
    %283 = vmatpush.msra.mxu0 %v282
    %v284 = vand.u32 %v83, 4294901760
    %v285 = vsub.f32 %v83, %v284
    %286 = vmatpush.msra.mxu0 %v285
    %v287 = vand.u32 %v81, 4294901760
    %v288 = vsub.f32 %v81, %v287
    %289 = vmatpush.msra.mxu0 %v288
    %v290 = vand.u32 %v79, 4294901760
    %v291 = vsub.f32 %v79, %v290
    %292 = vmatpush.msra.mxu0 %v291
    %v293 = vand.u32 %v77, 4294901760
    %v294 = vsub.f32 %v77, %v293
    %295 = vmatpush.msra.mxu0 %v294
    %v296 = vand.u32 %v75, 4294901760
    %v297 = vsub.f32 %v75, %v296
    %298 = vmatpush.msra.mxu0 %v297
    %v299 = vand.u32 %v73, 4294901760
    %v300 = vsub.f32 %v73, %v299
    %301 = vmatpush.msra.mxu0 %v300
    %v302 = vand.u32 %v71, 4294901760
    %v303 = vsub.f32 %v71, %v302
    %304 = vmatpush.msra.mxu0 %v303
    %v305 = vand.u32 %v69, 4294901760
    %v306 = vsub.f32 %v69, %v305
    %307 = vmatpush.msra.mxu0 %v306
    %v308 = vand.u32 %v67, 4294901760
    %v309 = vsub.f32 %v67, %v308
    %310 = vmatpush.msra.mxu0 %v309
    %v311 = vand.u32 %v65, 4294901760
    %v312 = vsub.f32 %v65, %v311
    %313 = vmatpush.msra.mxu0 %v312
    %v314 = vand.u32 %v63, 4294901760
    %v315 = vsub.f32 %v63, %v314
    %316 = vmatpush.msra.mxu0 %v315
    %v317 = vand.u32 %v61, 4294901760
    %v318 = vsub.f32 %v61, %v317
    %319 = vmatmul.f32.gmra.mxu0 %v318
    %v320 = vpop.f32.mrf.mxu0
    %v321 = vadd.f32 %v267, %v320
    %322 = vdwg.mxu0
    %v323 = vand.u32 %v93, 4294901760
    %324 = vmatpush.msra.mxu0 %v323
    %v325 = vand.u32 %v91, 4294901760
    %326 = vmatpush.msra.mxu0 %v325
    %v327 = vand.u32 %v89, 4294901760
    %328 = vmatpush.msra.mxu0 %v327
    %v329 = vand.u32 %v87, 4294901760
    %330 = vmatpush.msra.mxu0 %v329
    %v331 = vand.u32 %v85, 4294901760
    %332 = vmatpush.msra.mxu0 %v331
    %v333 = vand.u32 %v83, 4294901760
    %334 = vmatpush.msra.mxu0 %v333
    %v335 = vand.u32 %v81, 4294901760
    %336 = vmatpush.msra.mxu0 %v335
    %v337 = vand.u32 %v79, 4294901760
    %338 = vmatpush.msra.mxu0 %v337
    %v339 = vand.u32 %v77, 4294901760
    %340 = vmatpush.msra.mxu0 %v339
    %v341 = vand.u32 %v75, 4294901760
    %342 = vmatpush.msra.mxu0 %v341
    %v343 = vand.u32 %v73, 4294901760
    %344 = vmatpush.msra.mxu0 %v343
    %v345 = vand.u32 %v71, 4294901760
    %346 = vmatpush.msra.mxu0 %v345
    %v347 = vand.u32 %v69, 4294901760
    %348 = vmatpush.msra.mxu0 %v347
    %v349 = vand.u32 %v67, 4294901760
    %350 = vmatpush.msra.mxu0 %v349
    %v351 = vand.u32 %v65, 4294901760
    %352 = vmatpush.msra.mxu0 %v351
    %v353 = vand.u32 %v63, 4294901760
    %354 = vmatpush.msra.mxu0 %v353
    %v355 = vand.u32 %v61, 4294901760
    %v356 = vsub.f32 %v61, %v355
    %v357 = vand.u32 %v356, 4294901760
    %358 = vmatmul.f32.gmra.mxu0 %v357
    %v359 = vpop.f32.mrf.mxu0
    %v360 = vadd.f32 %v321, %v359
    %361 = vdwg.mxu0
    %v362 = vand.u32 %v93, 4294901760
    %v363 = vsub.f32 %v93, %v362
    %v364 = vand.u32 %v363, 4294901760
    %365 = vmatpush.msra.mxu0 %v364
    %v366 = vand.u32 %v91, 4294901760
    %v367 = vsub.f32 %v91, %v366
    %v368 = vand.u32 %v367, 4294901760
    %369 = vmatpush.msra.mxu0 %v368
    %v370 = vand.u32 %v89, 4294901760
    %v371 = vsub.f32 %v89, %v370
    %v372 = vand.u32 %v371, 4294901760
    %373 = vmatpush.msra.mxu0 %v372
    %v374 = vand.u32 %v87, 4294901760
    %v375 = vsub.f32 %v87, %v374
    %v376 = vand.u32 %v375, 4294901760
    %377 = vmatpush.msra.mxu0 %v376
    %v378 = vand.u32 %v85, 4294901760
    %v379 = vsub.f32 %v85, %v378
    %v380 = vand.u32 %v379, 4294901760
    %381 = vmatpush.msra.mxu0 %v380
    %v382 = vand.u32 %v83, 4294901760
    %v383 = vsub.f32 %v83, %v382
    %v384 = vand.u32 %v383, 4294901760
    %385 = vmatpush.msra.mxu0 %v384
    %v386 = vand.u32 %v81, 4294901760
    %v387 = vsub.f32 %v81, %v386
    %v388 = vand.u32 %v387, 4294901760
    %389 = vmatpush.msra.mxu0 %v388
    %v390 = vand.u32 %v79, 4294901760
    %v391 = vsub.f32 %v79, %v390
    %v392 = vand.u32 %v391, 4294901760
    %393 = vmatpush.msra.mxu0 %v392
    %v394 = vand.u32 %v77, 4294901760
    %v395 = vsub.f32 %v77, %v394
    %v396 = vand.u32 %v395, 4294901760
    %397 = vmatpush.msra.mxu0 %v396
    %v398 = vand.u32 %v75, 4294901760
    %v399 = vsub.f32 %v75, %v398
    %v400 = vand.u32 %v399, 4294901760
    %401 = vmatpush.msra.mxu0 %v400
    %v402 = vand.u32 %v73, 4294901760
    %v403 = vsub.f32 %v73, %v402
    %v404 = vand.u32 %v403, 4294901760
    %405 = vmatpush.msra.mxu0 %v404
    %v406 = vand.u32 %v71, 4294901760
    %v407 = vsub.f32 %v71, %v406
    %v408 = vand.u32 %v407, 4294901760
    %409 = vmatpush.msra.mxu0 %v408
    %v410 = vand.u32 %v69, 4294901760
    %v411 = vsub.f32 %v69, %v410
    %v412 = vand.u32 %v411, 4294901760
    %413 = vmatpush.msra.mxu0 %v412
    %v414 = vand.u32 %v67, 4294901760
    %v415 = vsub.f32 %v67, %v414
    %v416 = vand.u32 %v415, 4294901760
    %417 = vmatpush.msra.mxu0 %v416
    %v418 = vand.u32 %v65, 4294901760
    %v419 = vsub.f32 %v65, %v418
    %v420 = vand.u32 %v419, 4294901760
    %421 = vmatpush.msra.mxu0 %v420
    %v422 = vand.u32 %v63, 4294901760
    %v423 = vsub.f32 %v63, %v422
    %v424 = vand.u32 %v423, 4294901760
    %425 = vmatpush.msra.mxu0 %v424
    %v426 = vand.u32 %v61, 4294901760
    %427 = vmatmul.f32.gmra.mxu0 %v426
    %v428 = vpop.f32.mrf.mxu0
    %v429 = vadd.f32 %v360, %v428
    %430 = vdwg.mxu0
    %v431 = vand.u32 %v93, 4294901760
    %432 = vmatpush.msra.mxu0 %v431
    %v433 = vand.u32 %v91, 4294901760
    %434 = vmatpush.msra.mxu0 %v433
    %v435 = vand.u32 %v89, 4294901760
    %436 = vmatpush.msra.mxu0 %v435
    %v437 = vand.u32 %v87, 4294901760
    %438 = vmatpush.msra.mxu0 %v437
    %v439 = vand.u32 %v85, 4294901760
    %440 = vmatpush.msra.mxu0 %v439
    %v441 = vand.u32 %v83, 4294901760
    %442 = vmatpush.msra.mxu0 %v441
    %v443 = vand.u32 %v81, 4294901760
    %444 = vmatpush.msra.mxu0 %v443
    %v445 = vand.u32 %v79, 4294901760
    %446 = vmatpush.msra.mxu0 %v445
    %v447 = vand.u32 %v77, 4294901760
    %448 = vmatpush.msra.mxu0 %v447
    %v449 = vand.u32 %v75, 4294901760
    %450 = vmatpush.msra.mxu0 %v449
    %v451 = vand.u32 %v73, 4294901760
    %452 = vmatpush.msra.mxu0 %v451
    %v453 = vand.u32 %v71, 4294901760
    %454 = vmatpush.msra.mxu0 %v453
    %v455 = vand.u32 %v69, 4294901760
    %456 = vmatpush.msra.mxu0 %v455
    %v457 = vand.u32 %v67, 4294901760
    %458 = vmatpush.msra.mxu0 %v457
    %v459 = vand.u32 %v65, 4294901760
    %460 = vmatpush.msra.mxu0 %v459
    %v461 = vand.u32 %v63, 4294901760
    %462 = vmatpush.msra.mxu0 %v461
    %v463 = vand.u32 %v61, 4294901760
    %464 = vmatmul.f32.gmra.mxu0 %v463
    %v465 = vpop.f32.mrf.mxu0
    %v466 = vadd.f32 %v429, %v465
    %467 = vdwg.mxu0
    %v468 = vand.u32 %v125, 4294901760
    %469 = vmatpush.msra.mxu0 %v468
    %v470 = vand.u32 %v123, 4294901760
    %471 = vmatpush.msra.mxu0 %v470
    %v472 = vand.u32 %v121, 4294901760
    %473 = vmatpush.msra.mxu0 %v472
    %v474 = vand.u32 %v119, 4294901760
    %475 = vmatpush.msra.mxu0 %v474
    %v476 = vand.u32 %v117, 4294901760
    %477 = vmatpush.msra.mxu0 %v476
    %v478 = vand.u32 %v115, 4294901760
    %479 = vmatpush.msra.mxu0 %v478
    %v480 = vand.u32 %v113, 4294901760
    %481 = vmatpush.msra.mxu0 %v480
    %v482 = vand.u32 %v111, 4294901760
    %483 = vmatpush.msra.mxu0 %v482
    %v484 = vand.u32 %v109, 4294901760
    %485 = vmatpush.msra.mxu0 %v484
    %v486 = vand.u32 %v107, 4294901760
    %487 = vmatpush.msra.mxu0 %v486
    %v488 = vand.u32 %v105, 4294901760
    %489 = vmatpush.msra.mxu0 %v488
    %v490 = vand.u32 %v103, 4294901760
    %491 = vmatpush.msra.mxu0 %v490
    %v492 = vand.u32 %v101, 4294901760
    %493 = vmatpush.msra.mxu0 %v492
    %v494 = vand.u32 %v99, 4294901760
    %495 = vmatpush.msra.mxu0 %v494
    %v496 = vand.u32 %v97, 4294901760
    %497 = vmatpush.msra.mxu0 %v496
    %v498 = vand.u32 %v95, 4294901760
    %499 = vmatpush.msra.mxu0 %v498
    %v500 = vand.u32 %v62, 4294901760
    %v501 = vsub.f32 %v62, %v500
    %v502 = vand.u32 %v501, 4294901760
    %v503 = vsub.f32 %v501, %v502
    %v504 = vand.u32 %v503, 4294901760
    %505 = vmatmul.f32.gmra.mxu0 %v504
    %v506 = vpop.f32.mrf.mxu0
    %v507 = vadd.f32 %v466, %v506
    %508 = vdwg.mxu0
    %v509 = vand.u32 %v125, 4294901760
    %v510 = vsub.f32 %v125, %v509
    %v511 = vand.u32 %v510, 4294901760
    %v512 = vsub.f32 %v510, %v511
    %v513 = vand.u32 %v512, 4294901760
    %514 = vmatpush.msra.mxu0 %v513
    %v515 = vand.u32 %v123, 4294901760
    %v516 = vsub.f32 %v123, %v515
    %v517 = vand.u32 %v516, 4294901760
    %v518 = vsub.f32 %v516, %v517
    %v519 = vand.u32 %v518, 4294901760
    %520 = vmatpush.msra.mxu0 %v519
    %v521 = vand.u32 %v121, 4294901760
    %v522 = vsub.f32 %v121, %v521
    %v523 = vand.u32 %v522, 4294901760
    %v524 = vsub.f32 %v522, %v523
    %v525 = vand.u32 %v524, 4294901760
    %526 = vmatpush.msra.mxu0 %v525
    %v527 = vand.u32 %v119, 4294901760
    %v528 = vsub.f32 %v119, %v527
    %v529 = vand.u32 %v528, 4294901760
    %v530 = vsub.f32 %v528, %v529
    %v531 = vand.u32 %v530, 4294901760
    %532 = vmatpush.msra.mxu0 %v531
    %v533 = vand.u32 %v117, 4294901760
    %v534 = vsub.f32 %v117, %v533
    %v535 = vand.u32 %v534, 4294901760
    %v536 = vsub.f32 %v534, %v535
    %v537 = vand.u32 %v536, 4294901760
    %538 = vmatpush.msra.mxu0 %v537
    %v539 = vand.u32 %v115, 4294901760
    %v540 = vsub.f32 %v115, %v539
    %v541 = vand.u32 %v540, 4294901760
    %v542 = vsub.f32 %v540, %v541
    %v543 = vand.u32 %v542, 4294901760
    %544 = vmatpush.msra.mxu0 %v543
    %v545 = vand.u32 %v113, 4294901760
    %v546 = vsub.f32 %v113, %v545
    %v547 = vand.u32 %v546, 4294901760
    %v548 = vsub.f32 %v546, %v547
    %v549 = vand.u32 %v548, 4294901760
    %550 = vmatpush.msra.mxu0 %v549
    %v551 = vand.u32 %v111, 4294901760
    %v552 = vsub.f32 %v111, %v551
    %v553 = vand.u32 %v552, 4294901760
    %v554 = vsub.f32 %v552, %v553
    %v555 = vand.u32 %v554, 4294901760
    %556 = vmatpush.msra.mxu0 %v555
    %v557 = vand.u32 %v109, 4294901760
    %v558 = vsub.f32 %v109, %v557
    %v559 = vand.u32 %v558, 4294901760
    %v560 = vsub.f32 %v558, %v559
    %v561 = vand.u32 %v560, 4294901760
    %562 = vmatpush.msra.mxu0 %v561
    %v563 = vand.u32 %v107, 4294901760
    %v564 = vsub.f32 %v107, %v563
    %v565 = vand.u32 %v564, 4294901760
    %v566 = vsub.f32 %v564, %v565
    %v567 = vand.u32 %v566, 4294901760
    %568 = vmatpush.msra.mxu0 %v567
    %v569 = vand.u32 %v105, 4294901760
    %v570 = vsub.f32 %v105, %v569
    %v571 = vand.u32 %v570, 4294901760
    %v572 = vsub.f32 %v570, %v571
    %v573 = vand.u32 %v572, 4294901760
    %574 = vmatpush.msra.mxu0 %v573
    %v575 = vand.u32 %v103, 4294901760
    %v576 = vsub.f32 %v103, %v575
    %v577 = vand.u32 %v576, 4294901760
    %v578 = vsub.f32 %v576, %v577
    %v579 = vand.u32 %v578, 4294901760
    %580 = vmatpush.msra.mxu0 %v579
    %v581 = vand.u32 %v101, 4294901760
    %v582 = vsub.f32 %v101, %v581
    %v583 = vand.u32 %v582, 4294901760
    %v584 = vsub.f32 %v582, %v583
    %v585 = vand.u32 %v584, 4294901760
    %586 = vmatpush.msra.mxu0 %v585
    %v587 = vand.u32 %v99, 4294901760
    %v588 = vsub.f32 %v99, %v587
    %v589 = vand.u32 %v588, 4294901760
    %v590 = vsub.f32 %v588, %v589
    %v591 = vand.u32 %v590, 4294901760
    %592 = vmatpush.msra.mxu0 %v591
    %v593 = vand.u32 %v97, 4294901760
    %v594 = vsub.f32 %v97, %v593
    %v595 = vand.u32 %v594, 4294901760
    %v596 = vsub.f32 %v594, %v595
    %v597 = vand.u32 %v596, 4294901760
    %598 = vmatpush.msra.mxu0 %v597
    %v599 = vand.u32 %v95, 4294901760
    %v600 = vsub.f32 %v95, %v599
    %v601 = vand.u32 %v600, 4294901760
    %v602 = vsub.f32 %v600, %v601
    %v603 = vand.u32 %v602, 4294901760
    %604 = vmatpush.msra.mxu0 %v603
    %v605 = vand.u32 %v62, 4294901760
    %606 = vmatmul.f32.gmra.mxu0 %v605
    %v607 = vpop.f32.mrf.mxu0
    %v608 = vadd.f32 %v507, %v607
    %609 = vdwg.mxu0
    %v610 = vand.u32 %v125, 4294901760
    %v611 = vsub.f32 %v125, %v610
    %612 = vmatpush.msra.mxu0 %v611
    %v613 = vand.u32 %v123, 4294901760
    %v614 = vsub.f32 %v123, %v613
    %615 = vmatpush.msra.mxu0 %v614
    %v616 = vand.u32 %v121, 4294901760
    %v617 = vsub.f32 %v121, %v616
    %618 = vmatpush.msra.mxu0 %v617
    %v619 = vand.u32 %v119, 4294901760
    %v620 = vsub.f32 %v119, %v619
    %621 = vmatpush.msra.mxu0 %v620
    %v622 = vand.u32 %v117, 4294901760
    %v623 = vsub.f32 %v117, %v622
    %624 = vmatpush.msra.mxu0 %v623
    %v625 = vand.u32 %v115, 4294901760
    %v626 = vsub.f32 %v115, %v625
    %627 = vmatpush.msra.mxu0 %v626
    %v628 = vand.u32 %v113, 4294901760
    %v629 = vsub.f32 %v113, %v628
    %630 = vmatpush.msra.mxu0 %v629
    %v631 = vand.u32 %v111, 4294901760
    %v632 = vsub.f32 %v111, %v631
    %633 = vmatpush.msra.mxu0 %v632
    %v634 = vand.u32 %v109, 4294901760
    %v635 = vsub.f32 %v109, %v634
    %636 = vmatpush.msra.mxu0 %v635
    %v637 = vand.u32 %v107, 4294901760
    %v638 = vsub.f32 %v107, %v637
    %639 = vmatpush.msra.mxu0 %v638
    %v640 = vand.u32 %v105, 4294901760
    %v641 = vsub.f32 %v105, %v640
    %642 = vmatpush.msra.mxu0 %v641
    %v643 = vand.u32 %v103, 4294901760
    %v644 = vsub.f32 %v103, %v643
    %645 = vmatpush.msra.mxu0 %v644
    %v646 = vand.u32 %v101, 4294901760
    %v647 = vsub.f32 %v101, %v646
    %648 = vmatpush.msra.mxu0 %v647
    %v649 = vand.u32 %v99, 4294901760
    %v650 = vsub.f32 %v99, %v649
    %651 = vmatpush.msra.mxu0 %v650
    %v652 = vand.u32 %v97, 4294901760
    %v653 = vsub.f32 %v97, %v652
    %654 = vmatpush.msra.mxu0 %v653
    %v655 = vand.u32 %v95, 4294901760
    %v656 = vsub.f32 %v95, %v655
    %657 = vmatpush.msra.mxu0 %v656
    %v658 = vand.u32 %v62, 4294901760
    %v659 = vsub.f32 %v62, %v658
    %660 = vmatmul.f32.gmra.mxu0 %v659
    %v661 = vpop.f32.mrf.mxu0
    %v662 = vadd.f32 %v608, %v661
    %663 = vdwg.mxu0
    %v664 = vand.u32 %v125, 4294901760
    %665 = vmatpush.msra.mxu0 %v664
    %v666 = vand.u32 %v123, 4294901760
    %667 = vmatpush.msra.mxu0 %v666
    %v668 = vand.u32 %v121, 4294901760
    %669 = vmatpush.msra.mxu0 %v668
    %v670 = vand.u32 %v119, 4294901760
    %671 = vmatpush.msra.mxu0 %v670
    %v672 = vand.u32 %v117, 4294901760
    %673 = vmatpush.msra.mxu0 %v672
    %v674 = vand.u32 %v115, 4294901760
    %675 = vmatpush.msra.mxu0 %v674
    %v676 = vand.u32 %v113, 4294901760
    %677 = vmatpush.msra.mxu0 %v676
    %v678 = vand.u32 %v111, 4294901760
    %679 = vmatpush.msra.mxu0 %v678
    %v680 = vand.u32 %v109, 4294901760
    %681 = vmatpush.msra.mxu0 %v680
    %v682 = vand.u32 %v107, 4294901760
    %683 = vmatpush.msra.mxu0 %v682
    %v684 = vand.u32 %v105, 4294901760
    %685 = vmatpush.msra.mxu0 %v684
    %v686 = vand.u32 %v103, 4294901760
    %687 = vmatpush.msra.mxu0 %v686
    %v688 = vand.u32 %v101, 4294901760
    %689 = vmatpush.msra.mxu0 %v688
    %v690 = vand.u32 %v99, 4294901760
    %691 = vmatpush.msra.mxu0 %v690
    %v692 = vand.u32 %v97, 4294901760
    %693 = vmatpush.msra.mxu0 %v692
    %v694 = vand.u32 %v95, 4294901760
    %695 = vmatpush.msra.mxu0 %v694
    %v696 = vand.u32 %v62, 4294901760
    %v697 = vsub.f32 %v62, %v696
    %v698 = vand.u32 %v697, 4294901760
    %699 = vmatmul.f32.gmra.mxu0 %v698
    %v700 = vpop.f32.mrf.mxu0
    %v701 = vadd.f32 %v662, %v700
    %702 = vdwg.mxu0
    %v703 = vand.u32 %v125, 4294901760
    %v704 = vsub.f32 %v125, %v703
    %v705 = vand.u32 %v704, 4294901760
    %706 = vmatpush.msra.mxu0 %v705
    %v707 = vand.u32 %v123, 4294901760
    %v708 = vsub.f32 %v123, %v707
    %v709 = vand.u32 %v708, 4294901760
    %710 = vmatpush.msra.mxu0 %v709
    %v711 = vand.u32 %v121, 4294901760
    %v712 = vsub.f32 %v121, %v711
    %v713 = vand.u32 %v712, 4294901760
    %714 = vmatpush.msra.mxu0 %v713
    %v715 = vand.u32 %v119, 4294901760
    %v716 = vsub.f32 %v119, %v715
    %v717 = vand.u32 %v716, 4294901760
    %718 = vmatpush.msra.mxu0 %v717
    %v719 = vand.u32 %v117, 4294901760
    %v720 = vsub.f32 %v117, %v719
    %v721 = vand.u32 %v720, 4294901760
    %722 = vmatpush.msra.mxu0 %v721
    %v723 = vand.u32 %v115, 4294901760
    %v724 = vsub.f32 %v115, %v723
    %v725 = vand.u32 %v724, 4294901760
    %726 = vmatpush.msra.mxu0 %v725
    %v727 = vand.u32 %v113, 4294901760
    %v728 = vsub.f32 %v113, %v727
    %v729 = vand.u32 %v728, 4294901760
    %730 = vmatpush.msra.mxu0 %v729
    %v731 = vand.u32 %v111, 4294901760
    %v732 = vsub.f32 %v111, %v731
    %v733 = vand.u32 %v732, 4294901760
    %734 = vmatpush.msra.mxu0 %v733
    %v735 = vand.u32 %v109, 4294901760
    %v736 = vsub.f32 %v109, %v735
    %v737 = vand.u32 %v736, 4294901760
    %738 = vmatpush.msra.mxu0 %v737
    %v739 = vand.u32 %v107, 4294901760
    %v740 = vsub.f32 %v107, %v739
    %v741 = vand.u32 %v740, 4294901760
    %742 = vmatpush.msra.mxu0 %v741
    %v743 = vand.u32 %v105, 4294901760
    %v744 = vsub.f32 %v105, %v743
    %v745 = vand.u32 %v744, 4294901760
    %746 = vmatpush.msra.mxu0 %v745
    %v747 = vand.u32 %v103, 4294901760
    %v748 = vsub.f32 %v103, %v747
    %v749 = vand.u32 %v748, 4294901760
    %750 = vmatpush.msra.mxu0 %v749
    %v751 = vand.u32 %v101, 4294901760
    %v752 = vsub.f32 %v101, %v751
    %v753 = vand.u32 %v752, 4294901760
    %754 = vmatpush.msra.mxu0 %v753
    %v755 = vand.u32 %v99, 4294901760
    %v756 = vsub.f32 %v99, %v755
    %v757 = vand.u32 %v756, 4294901760
    %758 = vmatpush.msra.mxu0 %v757
    %v759 = vand.u32 %v97, 4294901760
    %v760 = vsub.f32 %v97, %v759
    %v761 = vand.u32 %v760, 4294901760
    %762 = vmatpush.msra.mxu0 %v761
    %v763 = vand.u32 %v95, 4294901760
    %v764 = vsub.f32 %v95, %v763
    %v765 = vand.u32 %v764, 4294901760
    %766 = vmatpush.msra.mxu0 %v765
    %v767 = vand.u32 %v62, 4294901760
    %768 = vmatmul.f32.gmra.mxu0 %v767
    %v769 = vpop.f32.mrf.mxu0
    %v770 = vadd.f32 %v701, %v769
    %771 = vdwg.mxu0
    %v772 = vand.u32 %v125, 4294901760
    %773 = vmatpush.msra.mxu0 %v772
    %v774 = vand.u32 %v123, 4294901760
    %775 = vmatpush.msra.mxu0 %v774
    %v776 = vand.u32 %v121, 4294901760
    %777 = vmatpush.msra.mxu0 %v776
    %v778 = vand.u32 %v119, 4294901760
    %779 = vmatpush.msra.mxu0 %v778
    %v780 = vand.u32 %v117, 4294901760
    %781 = vmatpush.msra.mxu0 %v780
    %v782 = vand.u32 %v115, 4294901760
    %783 = vmatpush.msra.mxu0 %v782
    %v784 = vand.u32 %v113, 4294901760
    %785 = vmatpush.msra.mxu0 %v784
    %v786 = vand.u32 %v111, 4294901760
    %787 = vmatpush.msra.mxu0 %v786
    %v788 = vand.u32 %v109, 4294901760
    %789 = vmatpush.msra.mxu0 %v788
    %v790 = vand.u32 %v107, 4294901760
    %791 = vmatpush.msra.mxu0 %v790
    %v792 = vand.u32 %v105, 4294901760
    %793 = vmatpush.msra.mxu0 %v792
    %v794 = vand.u32 %v103, 4294901760
    %795 = vmatpush.msra.mxu0 %v794
    %v796 = vand.u32 %v101, 4294901760
    %797 = vmatpush.msra.mxu0 %v796
    %v798 = vand.u32 %v99, 4294901760
    %799 = vmatpush.msra.mxu0 %v798
    %v800 = vand.u32 %v97, 4294901760
    %801 = vmatpush.msra.mxu0 %v800
    %v802 = vand.u32 %v95, 4294901760
    %803 = vmatpush.msra.mxu0 %v802
    %v804 = vand.u32 %v62, 4294901760
    %805 = vmatmul.f32.gmra.mxu0 %v804
    %v806 = vpop.f32.mrf.mxu0
    %v807 = vadd.f32 %v770, %v806
    %808 = vdwg.mxu0
    %v809 = vand.u32 %v94, 4294901760
    %810 = vmatpush.msra.mxu0 %v809
    %v811 = vand.u32 %v92, 4294901760
    %812 = vmatpush.msra.mxu0 %v811
    %v813 = vand.u32 %v90, 4294901760
    %814 = vmatpush.msra.mxu0 %v813
    %v815 = vand.u32 %v88, 4294901760
    %816 = vmatpush.msra.mxu0 %v815
    %v817 = vand.u32 %v86, 4294901760
    %818 = vmatpush.msra.mxu0 %v817
    %v819 = vand.u32 %v84, 4294901760
    %820 = vmatpush.msra.mxu0 %v819
    %v821 = vand.u32 %v82, 4294901760
    %822 = vmatpush.msra.mxu0 %v821
    %v823 = vand.u32 %v80, 4294901760
    %824 = vmatpush.msra.mxu0 %v823
    %v825 = vand.u32 %v78, 4294901760
    %826 = vmatpush.msra.mxu0 %v825
    %v827 = vand.u32 %v76, 4294901760
    %828 = vmatpush.msra.mxu0 %v827
    %v829 = vand.u32 %v74, 4294901760
    %830 = vmatpush.msra.mxu0 %v829
    %v831 = vand.u32 %v72, 4294901760
    %832 = vmatpush.msra.mxu0 %v831
    %v833 = vand.u32 %v70, 4294901760
    %834 = vmatpush.msra.mxu0 %v833
    %v835 = vand.u32 %v68, 4294901760
    %836 = vmatpush.msra.mxu0 %v835
    %v837 = vand.u32 %v66, 4294901760
    %838 = vmatpush.msra.mxu0 %v837
    %v839 = vand.u32 %v64, 4294901760
    %840 = vmatpush.msra.mxu0 %v839
    %v841 = vand.u32 %v61, 4294901760
    %v842 = vsub.f32 %v61, %v841
    %v843 = vand.u32 %v842, 4294901760
    %v844 = vsub.f32 %v842, %v843
    %v845 = vand.u32 %v844, 4294901760
    %846 = vmatmul.f32.gmra.mxu0 %v845
    %v847 = vpop.f32.mrf.mxu0
    %v848 = vadd.f32 0.0, %v847
    %849 = vdwg.mxu0
    %v850 = vand.u32 %v94, 4294901760
    %v851 = vsub.f32 %v94, %v850
    %v852 = vand.u32 %v851, 4294901760
    %v853 = vsub.f32 %v851, %v852
    %v854 = vand.u32 %v853, 4294901760
    %855 = vmatpush.msra.mxu0 %v854
    %v856 = vand.u32 %v92, 4294901760
    %v857 = vsub.f32 %v92, %v856
    %v858 = vand.u32 %v857, 4294901760
    %v859 = vsub.f32 %v857, %v858
    %v860 = vand.u32 %v859, 4294901760
    %861 = vmatpush.msra.mxu0 %v860
    %v862 = vand.u32 %v90, 4294901760
    %v863 = vsub.f32 %v90, %v862
    %v864 = vand.u32 %v863, 4294901760
    %v865 = vsub.f32 %v863, %v864
    %v866 = vand.u32 %v865, 4294901760
    %867 = vmatpush.msra.mxu0 %v866
    %v868 = vand.u32 %v88, 4294901760
    %v869 = vsub.f32 %v88, %v868
    %v870 = vand.u32 %v869, 4294901760
    %v871 = vsub.f32 %v869, %v870
    %v872 = vand.u32 %v871, 4294901760
    %873 = vmatpush.msra.mxu0 %v872
    %v874 = vand.u32 %v86, 4294901760
    %v875 = vsub.f32 %v86, %v874
    %v876 = vand.u32 %v875, 4294901760
    %v877 = vsub.f32 %v875, %v876
    %v878 = vand.u32 %v877, 4294901760
    %879 = vmatpush.msra.mxu0 %v878
    %v880 = vand.u32 %v84, 4294901760
    %v881 = vsub.f32 %v84, %v880
    %v882 = vand.u32 %v881, 4294901760
    %v883 = vsub.f32 %v881, %v882
    %v884 = vand.u32 %v883, 4294901760
    %885 = vmatpush.msra.mxu0 %v884
    %v886 = vand.u32 %v82, 4294901760
    %v887 = vsub.f32 %v82, %v886
    %v888 = vand.u32 %v887, 4294901760
    %v889 = vsub.f32 %v887, %v888
    %v890 = vand.u32 %v889, 4294901760
    %891 = vmatpush.msra.mxu0 %v890
    %v892 = vand.u32 %v80, 4294901760
    %v893 = vsub.f32 %v80, %v892
    %v894 = vand.u32 %v893, 4294901760
    %v895 = vsub.f32 %v893, %v894
    %v896 = vand.u32 %v895, 4294901760
    %897 = vmatpush.msra.mxu0 %v896
    %v898 = vand.u32 %v78, 4294901760
    %v899 = vsub.f32 %v78, %v898
    %v900 = vand.u32 %v899, 4294901760
    %v901 = vsub.f32 %v899, %v900
    %v902 = vand.u32 %v901, 4294901760
    %903 = vmatpush.msra.mxu0 %v902
    %v904 = vand.u32 %v76, 4294901760
    %v905 = vsub.f32 %v76, %v904
    %v906 = vand.u32 %v905, 4294901760
    %v907 = vsub.f32 %v905, %v906
    %v908 = vand.u32 %v907, 4294901760
    %909 = vmatpush.msra.mxu0 %v908
    %v910 = vand.u32 %v74, 4294901760
    %v911 = vsub.f32 %v74, %v910
    %v912 = vand.u32 %v911, 4294901760
    %v913 = vsub.f32 %v911, %v912
    %v914 = vand.u32 %v913, 4294901760
    %915 = vmatpush.msra.mxu0 %v914
    %v916 = vand.u32 %v72, 4294901760
    %v917 = vsub.f32 %v72, %v916
    %v918 = vand.u32 %v917, 4294901760
    %v919 = vsub.f32 %v917, %v918
    %v920 = vand.u32 %v919, 4294901760
    %921 = vmatpush.msra.mxu0 %v920
    %v922 = vand.u32 %v70, 4294901760
    %v923 = vsub.f32 %v70, %v922
    %v924 = vand.u32 %v923, 4294901760
    %v925 = vsub.f32 %v923, %v924
    %v926 = vand.u32 %v925, 4294901760
    %927 = vmatpush.msra.mxu0 %v926
    %v928 = vand.u32 %v68, 4294901760
    %v929 = vsub.f32 %v68, %v928
    %v930 = vand.u32 %v929, 4294901760
    %v931 = vsub.f32 %v929, %v930
    %v932 = vand.u32 %v931, 4294901760
    %933 = vmatpush.msra.mxu0 %v932
    %v934 = vand.u32 %v66, 4294901760
    %v935 = vsub.f32 %v66, %v934
    %v936 = vand.u32 %v935, 4294901760
    %v937 = vsub.f32 %v935, %v936
    %v938 = vand.u32 %v937, 4294901760
    %939 = vmatpush.msra.mxu0 %v938
    %v940 = vand.u32 %v64, 4294901760
    %v941 = vsub.f32 %v64, %v940
    %v942 = vand.u32 %v941, 4294901760
    %v943 = vsub.f32 %v941, %v942
    %v944 = vand.u32 %v943, 4294901760
    %945 = vmatpush.msra.mxu0 %v944
    %v946 = vand.u32 %v61, 4294901760
    %947 = vmatmul.f32.gmra.mxu0 %v946
    %v948 = vpop.f32.mrf.mxu0
    %v949 = vadd.f32 %v848, %v948
    %950 = vdwg.mxu0
    %v951 = vand.u32 %v94, 4294901760
    %v952 = vsub.f32 %v94, %v951
    %953 = vmatpush.msra.mxu0 %v952
    %v954 = vand.u32 %v92, 4294901760
    %v955 = vsub.f32 %v92, %v954
    %956 = vmatpush.msra.mxu0 %v955
    %v957 = vand.u32 %v90, 4294901760
    %v958 = vsub.f32 %v90, %v957
    %959 = vmatpush.msra.mxu0 %v958
    %v960 = vand.u32 %v88, 4294901760
    %v961 = vsub.f32 %v88, %v960
    %962 = vmatpush.msra.mxu0 %v961
    %v963 = vand.u32 %v86, 4294901760
    %v964 = vsub.f32 %v86, %v963
    %965 = vmatpush.msra.mxu0 %v964
    %v966 = vand.u32 %v84, 4294901760
    %v967 = vsub.f32 %v84, %v966
    %968 = vmatpush.msra.mxu0 %v967
    %v969 = vand.u32 %v82, 4294901760
    %v970 = vsub.f32 %v82, %v969
    %971 = vmatpush.msra.mxu0 %v970
    %v972 = vand.u32 %v80, 4294901760
    %v973 = vsub.f32 %v80, %v972
    %974 = vmatpush.msra.mxu0 %v973
    %v975 = vand.u32 %v78, 4294901760
    %v976 = vsub.f32 %v78, %v975
    %977 = vmatpush.msra.mxu0 %v976
    %v978 = vand.u32 %v76, 4294901760
    %v979 = vsub.f32 %v76, %v978
    %980 = vmatpush.msra.mxu0 %v979
    %v981 = vand.u32 %v74, 4294901760
    %v982 = vsub.f32 %v74, %v981
    %983 = vmatpush.msra.mxu0 %v982
    %v984 = vand.u32 %v72, 4294901760
    %v985 = vsub.f32 %v72, %v984
    %986 = vmatpush.msra.mxu0 %v985
    %v987 = vand.u32 %v70, 4294901760
    %v988 = vsub.f32 %v70, %v987
    %989 = vmatpush.msra.mxu0 %v988
    %v990 = vand.u32 %v68, 4294901760
    %v991 = vsub.f32 %v68, %v990
    %992 = vmatpush.msra.mxu0 %v991
    %v993 = vand.u32 %v66, 4294901760
    %v994 = vsub.f32 %v66, %v993
    %995 = vmatpush.msra.mxu0 %v994
    %v996 = vand.u32 %v64, 4294901760
    %v997 = vsub.f32 %v64, %v996
    %998 = vmatpush.msra.mxu0 %v997
    %v999 = vand.u32 %v61, 4294901760
    %v1000 = vsub.f32 %v61, %v999
    %1001 = vmatmul.f32.gmra.mxu0 %v1000
    %v1002 = vpop.f32.mrf.mxu0
    %v1003 = vadd.f32 %v949, %v1002
    %1004 = vdwg.mxu0
    %v1005 = vand.u32 %v94, 4294901760
    %1006 = vmatpush.msra.mxu0 %v1005
    %v1007 = vand.u32 %v92, 4294901760
    %1008 = vmatpush.msra.mxu0 %v1007
    %v1009 = vand.u32 %v90, 4294901760
    %1010 = vmatpush.msra.mxu0 %v1009
    %v1011 = vand.u32 %v88, 4294901760
    %1012 = vmatpush.msra.mxu0 %v1011
    %v1013 = vand.u32 %v86, 4294901760
    %1014 = vmatpush.msra.mxu0 %v1013
    %v1015 = vand.u32 %v84, 4294901760
    %1016 = vmatpush.msra.mxu0 %v1015
    %v1017 = vand.u32 %v82, 4294901760
    %1018 = vmatpush.msra.mxu0 %v1017
    %v1019 = vand.u32 %v80, 4294901760
    %1020 = vmatpush.msra.mxu0 %v1019
    %v1021 = vand.u32 %v78, 4294901760
    %1022 = vmatpush.msra.mxu0 %v1021
    %v1023 = vand.u32 %v76, 4294901760
    %1024 = vmatpush.msra.mxu0 %v1023
    %v1025 = vand.u32 %v74, 4294901760
    %1026 = vmatpush.msra.mxu0 %v1025
    %v1027 = vand.u32 %v72, 4294901760
    %1028 = vmatpush.msra.mxu0 %v1027
    %v1029 = vand.u32 %v70, 4294901760
    %1030 = vmatpush.msra.mxu0 %v1029
    %v1031 = vand.u32 %v68, 4294901760
    %1032 = vmatpush.msra.mxu0 %v1031
    %v1033 = vand.u32 %v66, 4294901760
    %1034 = vmatpush.msra.mxu0 %v1033
    %v1035 = vand.u32 %v64, 4294901760
    %1036 = vmatpush.msra.mxu0 %v1035
    %v1037 = vand.u32 %v61, 4294901760
    %v1038 = vsub.f32 %v61, %v1037
    %v1039 = vand.u32 %v1038, 4294901760
    %1040 = vmatmul.f32.gmra.mxu0 %v1039
    %v1041 = vpop.f32.mrf.mxu0
    %v1042 = vadd.f32 %v1003, %v1041
    %1043 = vdwg.mxu0
    %v1044 = vand.u32 %v94, 4294901760
    %v1045 = vsub.f32 %v94, %v1044
    %v1046 = vand.u32 %v1045, 4294901760
    %1047 = vmatpush.msra.mxu0 %v1046
    %v1048 = vand.u32 %v92, 4294901760
    %v1049 = vsub.f32 %v92, %v1048
    %v1050 = vand.u32 %v1049, 4294901760
    %1051 = vmatpush.msra.mxu0 %v1050
    %v1052 = vand.u32 %v90, 4294901760
    %v1053 = vsub.f32 %v90, %v1052
    %v1054 = vand.u32 %v1053, 4294901760
    %1055 = vmatpush.msra.mxu0 %v1054
    %v1056 = vand.u32 %v88, 4294901760
    %v1057 = vsub.f32 %v88, %v1056
    %v1058 = vand.u32 %v1057, 4294901760
    %1059 = vmatpush.msra.mxu0 %v1058
    %v1060 = vand.u32 %v86, 4294901760
    %v1061 = vsub.f32 %v86, %v1060
    %v1062 = vand.u32 %v1061, 4294901760
    %1063 = vmatpush.msra.mxu0 %v1062
    %v1064 = vand.u32 %v84, 4294901760
    %v1065 = vsub.f32 %v84, %v1064
    %v1066 = vand.u32 %v1065, 4294901760
    %1067 = vmatpush.msra.mxu0 %v1066
    %v1068 = vand.u32 %v82, 4294901760
    %v1069 = vsub.f32 %v82, %v1068
    %v1070 = vand.u32 %v1069, 4294901760
    %1071 = vmatpush.msra.mxu0 %v1070
    %v1072 = vand.u32 %v80, 4294901760
    %v1073 = vsub.f32 %v80, %v1072
    %v1074 = vand.u32 %v1073, 4294901760
    %1075 = vmatpush.msra.mxu0 %v1074
    %v1076 = vand.u32 %v78, 4294901760
    %v1077 = vsub.f32 %v78, %v1076
    %v1078 = vand.u32 %v1077, 4294901760
    %1079 = vmatpush.msra.mxu0 %v1078
    %v1080 = vand.u32 %v76, 4294901760
    %v1081 = vsub.f32 %v76, %v1080
    %v1082 = vand.u32 %v1081, 4294901760
    %1083 = vmatpush.msra.mxu0 %v1082
    %v1084 = vand.u32 %v74, 4294901760
    %v1085 = vsub.f32 %v74, %v1084
    %v1086 = vand.u32 %v1085, 4294901760
    %1087 = vmatpush.msra.mxu0 %v1086
    %v1088 = vand.u32 %v72, 4294901760
    %v1089 = vsub.f32 %v72, %v1088
    %v1090 = vand.u32 %v1089, 4294901760
    %1091 = vmatpush.msra.mxu0 %v1090
    %v1092 = vand.u32 %v70, 4294901760
    %v1093 = vsub.f32 %v70, %v1092
    %v1094 = vand.u32 %v1093, 4294901760
    %1095 = vmatpush.msra.mxu0 %v1094
    %v1096 = vand.u32 %v68, 4294901760
    %v1097 = vsub.f32 %v68, %v1096
    %v1098 = vand.u32 %v1097, 4294901760
    %1099 = vmatpush.msra.mxu0 %v1098
    %v1100 = vand.u32 %v66, 4294901760
    %v1101 = vsub.f32 %v66, %v1100
    %v1102 = vand.u32 %v1101, 4294901760
    %1103 = vmatpush.msra.mxu0 %v1102
    %v1104 = vand.u32 %v64, 4294901760
    %v1105 = vsub.f32 %v64, %v1104
    %v1106 = vand.u32 %v1105, 4294901760
    %1107 = vmatpush.msra.mxu0 %v1106
    %v1108 = vand.u32 %v61, 4294901760
    %1109 = vmatmul.f32.gmra.mxu0 %v1108
    %v1110 = vpop.f32.mrf.mxu0
    %v1111 = vadd.f32 %v1042, %v1110
    %1112 = vdwg.mxu0
    %v1113 = vand.u32 %v94, 4294901760
    %1114 = vmatpush.msra.mxu0 %v1113
    %v1115 = vand.u32 %v92, 4294901760
    %1116 = vmatpush.msra.mxu0 %v1115
    %v1117 = vand.u32 %v90, 4294901760
    %1118 = vmatpush.msra.mxu0 %v1117
    %v1119 = vand.u32 %v88, 4294901760
    %1120 = vmatpush.msra.mxu0 %v1119
    %v1121 = vand.u32 %v86, 4294901760
    %1122 = vmatpush.msra.mxu0 %v1121
    %v1123 = vand.u32 %v84, 4294901760
    %1124 = vmatpush.msra.mxu0 %v1123
    %v1125 = vand.u32 %v82, 4294901760
    %1126 = vmatpush.msra.mxu0 %v1125
    %v1127 = vand.u32 %v80, 4294901760
    %1128 = vmatpush.msra.mxu0 %v1127
    %v1129 = vand.u32 %v78, 4294901760
    %1130 = vmatpush.msra.mxu0 %v1129
    %v1131 = vand.u32 %v76, 4294901760
    %1132 = vmatpush.msra.mxu0 %v1131
    %v1133 = vand.u32 %v74, 4294901760
    %1134 = vmatpush.msra.mxu0 %v1133
    %v1135 = vand.u32 %v72, 4294901760
    %1136 = vmatpush.msra.mxu0 %v1135
    %v1137 = vand.u32 %v70, 4294901760
    %1138 = vmatpush.msra.mxu0 %v1137
    %v1139 = vand.u32 %v68, 4294901760
    %1140 = vmatpush.msra.mxu0 %v1139
    %v1141 = vand.u32 %v66, 4294901760
    %1142 = vmatpush.msra.mxu0 %v1141
    %v1143 = vand.u32 %v64, 4294901760
    %1144 = vmatpush.msra.mxu0 %v1143
    %v1145 = vand.u32 %v61, 4294901760
    %1146 = vmatmul.f32.gmra.mxu0 %v1145
    %v1147 = vpop.f32.mrf.mxu0
    %v1148 = vadd.f32 %v1111, %v1147
    %1149 = vdwg.mxu0
    %v1150 = vand.u32 %v126, 4294901760
    %1151 = vmatpush.msra.mxu0 %v1150
    %v1152 = vand.u32 %v124, 4294901760
    %1153 = vmatpush.msra.mxu0 %v1152
    %v1154 = vand.u32 %v122, 4294901760
    %1155 = vmatpush.msra.mxu0 %v1154
    %v1156 = vand.u32 %v120, 4294901760
    %1157 = vmatpush.msra.mxu0 %v1156
    %v1158 = vand.u32 %v118, 4294901760
    %1159 = vmatpush.msra.mxu0 %v1158
    %v1160 = vand.u32 %v116, 4294901760
    %1161 = vmatpush.msra.mxu0 %v1160
    %v1162 = vand.u32 %v114, 4294901760
    %1163 = vmatpush.msra.mxu0 %v1162
    %v1164 = vand.u32 %v112, 4294901760
    %1165 = vmatpush.msra.mxu0 %v1164
    %v1166 = vand.u32 %v110, 4294901760
    %1167 = vmatpush.msra.mxu0 %v1166
    %v1168 = vand.u32 %v108, 4294901760
    %1169 = vmatpush.msra.mxu0 %v1168
    %v1170 = vand.u32 %v106, 4294901760
    %1171 = vmatpush.msra.mxu0 %v1170
    %v1172 = vand.u32 %v104, 4294901760
    %1173 = vmatpush.msra.mxu0 %v1172
    %v1174 = vand.u32 %v102, 4294901760
    %1175 = vmatpush.msra.mxu0 %v1174
    %v1176 = vand.u32 %v100, 4294901760
    %1177 = vmatpush.msra.mxu0 %v1176
    %v1178 = vand.u32 %v98, 4294901760
    %1179 = vmatpush.msra.mxu0 %v1178
    %v1180 = vand.u32 %v96, 4294901760
    %1181 = vmatpush.msra.mxu0 %v1180
    %v1182 = vand.u32 %v62, 4294901760
    %v1183 = vsub.f32 %v62, %v1182
    %v1184 = vand.u32 %v1183, 4294901760
    %v1185 = vsub.f32 %v1183, %v1184
    %v1186 = vand.u32 %v1185, 4294901760
    %1187 = vmatmul.f32.gmra.mxu0 %v1186
    %v1188 = vpop.f32.mrf.mxu0
    %v1189 = vadd.f32 %v1148, %v1188
    %1190 = vdwg.mxu0
    %v1191 = vand.u32 %v126, 4294901760
    %v1192 = vsub.f32 %v126, %v1191
    %v1193 = vand.u32 %v1192, 4294901760
    %v1194 = vsub.f32 %v1192, %v1193
    %v1195 = vand.u32 %v1194, 4294901760
    %1196 = vmatpush.msra.mxu0 %v1195
    %v1197 = vand.u32 %v124, 4294901760
    %v1198 = vsub.f32 %v124, %v1197
    %v1199 = vand.u32 %v1198, 4294901760
    %v1200 = vsub.f32 %v1198, %v1199
    %v1201 = vand.u32 %v1200, 4294901760
    %1202 = vmatpush.msra.mxu0 %v1201
    %v1203 = vand.u32 %v122, 4294901760
    %v1204 = vsub.f32 %v122, %v1203
    %v1205 = vand.u32 %v1204, 4294901760
    %v1206 = vsub.f32 %v1204, %v1205
    %v1207 = vand.u32 %v1206, 4294901760
    %1208 = vmatpush.msra.mxu0 %v1207
    %v1209 = vand.u32 %v120, 4294901760
    %v1210 = vsub.f32 %v120, %v1209
    %v1211 = vand.u32 %v1210, 4294901760
    %v1212 = vsub.f32 %v1210, %v1211
    %v1213 = vand.u32 %v1212, 4294901760
    %1214 = vmatpush.msra.mxu0 %v1213
    %v1215 = vand.u32 %v118, 4294901760
    %v1216 = vsub.f32 %v118, %v1215
    %v1217 = vand.u32 %v1216, 4294901760
    %v1218 = vsub.f32 %v1216, %v1217
    %v1219 = vand.u32 %v1218, 4294901760
    %1220 = vmatpush.msra.mxu0 %v1219
    %v1221 = vand.u32 %v116, 4294901760
    %v1222 = vsub.f32 %v116, %v1221
    %v1223 = vand.u32 %v1222, 4294901760
    %v1224 = vsub.f32 %v1222, %v1223
    %v1225 = vand.u32 %v1224, 4294901760
    %1226 = vmatpush.msra.mxu0 %v1225
    %v1227 = vand.u32 %v114, 4294901760
    %v1228 = vsub.f32 %v114, %v1227
    %v1229 = vand.u32 %v1228, 4294901760
    %v1230 = vsub.f32 %v1228, %v1229
    %v1231 = vand.u32 %v1230, 4294901760
    %1232 = vmatpush.msra.mxu0 %v1231
    %v1233 = vand.u32 %v112, 4294901760
    %v1234 = vsub.f32 %v112, %v1233
    %v1235 = vand.u32 %v1234, 4294901760
    %v1236 = vsub.f32 %v1234, %v1235
    %v1237 = vand.u32 %v1236, 4294901760
    %1238 = vmatpush.msra.mxu0 %v1237
    %v1239 = vand.u32 %v110, 4294901760
    %v1240 = vsub.f32 %v110, %v1239
    %v1241 = vand.u32 %v1240, 4294901760
    %v1242 = vsub.f32 %v1240, %v1241
    %v1243 = vand.u32 %v1242, 4294901760
    %1244 = vmatpush.msra.mxu0 %v1243
    %v1245 = vand.u32 %v108, 4294901760
    %v1246 = vsub.f32 %v108, %v1245
    %v1247 = vand.u32 %v1246, 4294901760
    %v1248 = vsub.f32 %v1246, %v1247
    %v1249 = vand.u32 %v1248, 4294901760
    %1250 = vmatpush.msra.mxu0 %v1249
    %v1251 = vand.u32 %v106, 4294901760
    %v1252 = vsub.f32 %v106, %v1251
    %v1253 = vand.u32 %v1252, 4294901760
    %v1254 = vsub.f32 %v1252, %v1253
    %v1255 = vand.u32 %v1254, 4294901760
    %1256 = vmatpush.msra.mxu0 %v1255
    %v1257 = vand.u32 %v104, 4294901760
    %v1258 = vsub.f32 %v104, %v1257
    %v1259 = vand.u32 %v1258, 4294901760
    %v1260 = vsub.f32 %v1258, %v1259
    %v1261 = vand.u32 %v1260, 4294901760
    %1262 = vmatpush.msra.mxu0 %v1261
    %v1263 = vand.u32 %v102, 4294901760
    %v1264 = vsub.f32 %v102, %v1263
    %v1265 = vand.u32 %v1264, 4294901760
    %v1266 = vsub.f32 %v1264, %v1265
    %v1267 = vand.u32 %v1266, 4294901760
    %1268 = vmatpush.msra.mxu0 %v1267
    %v1269 = vand.u32 %v100, 4294901760
    %v1270 = vsub.f32 %v100, %v1269
    %v1271 = vand.u32 %v1270, 4294901760
    %v1272 = vsub.f32 %v1270, %v1271
    %v1273 = vand.u32 %v1272, 4294901760
    %1274 = vmatpush.msra.mxu0 %v1273
    %v1275 = vand.u32 %v98, 4294901760
    %v1276 = vsub.f32 %v98, %v1275
    %v1277 = vand.u32 %v1276, 4294901760
    %v1278 = vsub.f32 %v1276, %v1277
    %v1279 = vand.u32 %v1278, 4294901760
    %1280 = vmatpush.msra.mxu0 %v1279
    %v1281 = vand.u32 %v96, 4294901760
    %v1282 = vsub.f32 %v96, %v1281
    %v1283 = vand.u32 %v1282, 4294901760
    %v1284 = vsub.f32 %v1282, %v1283
    %v1285 = vand.u32 %v1284, 4294901760
    %1286 = vmatpush.msra.mxu0 %v1285
    %v1287 = vand.u32 %v62, 4294901760
    %1288 = vmatmul.f32.gmra.mxu0 %v1287
    %v1289 = vpop.f32.mrf.mxu0
    %v1290 = vadd.f32 %v1189, %v1289
    %1291 = vdwg.mxu0
    %v1292 = vand.u32 %v126, 4294901760
    %v1293 = vsub.f32 %v126, %v1292
    %1294 = vmatpush.msra.mxu0 %v1293
    %v1295 = vand.u32 %v124, 4294901760
    %v1296 = vsub.f32 %v124, %v1295
    %1297 = vmatpush.msra.mxu0 %v1296
    %v1298 = vand.u32 %v122, 4294901760
    %v1299 = vsub.f32 %v122, %v1298
    %1300 = vmatpush.msra.mxu0 %v1299
    %v1301 = vand.u32 %v120, 4294901760
    %v1302 = vsub.f32 %v120, %v1301
    %1303 = vmatpush.msra.mxu0 %v1302
    %v1304 = vand.u32 %v118, 4294901760
    %v1305 = vsub.f32 %v118, %v1304
    %1306 = vmatpush.msra.mxu0 %v1305
    %v1307 = vand.u32 %v116, 4294901760
    %v1308 = vsub.f32 %v116, %v1307
    %1309 = vmatpush.msra.mxu0 %v1308
    %v1310 = vand.u32 %v114, 4294901760
    %v1311 = vsub.f32 %v114, %v1310
    %1312 = vmatpush.msra.mxu0 %v1311
    %v1313 = vand.u32 %v112, 4294901760
    %v1314 = vsub.f32 %v112, %v1313
    %1315 = vmatpush.msra.mxu0 %v1314
    %v1316 = vand.u32 %v110, 4294901760
    %v1317 = vsub.f32 %v110, %v1316
    %1318 = vmatpush.msra.mxu0 %v1317
    %v1319 = vand.u32 %v108, 4294901760
    %v1320 = vsub.f32 %v108, %v1319
    %1321 = vmatpush.msra.mxu0 %v1320
    %v1322 = vand.u32 %v106, 4294901760
    %v1323 = vsub.f32 %v106, %v1322
    %1324 = vmatpush.msra.mxu0 %v1323
    %v1325 = vand.u32 %v104, 4294901760
    %v1326 = vsub.f32 %v104, %v1325
    %1327 = vmatpush.msra.mxu0 %v1326
    %v1328 = vand.u32 %v102, 4294901760
    %v1329 = vsub.f32 %v102, %v1328
    %1330 = vmatpush.msra.mxu0 %v1329
    %v1331 = vand.u32 %v100, 4294901760
    %v1332 = vsub.f32 %v100, %v1331
    %1333 = vmatpush.msra.mxu0 %v1332
    %v1334 = vand.u32 %v98, 4294901760
    %v1335 = vsub.f32 %v98, %v1334
    %1336 = vmatpush.msra.mxu0 %v1335
    %v1337 = vand.u32 %v96, 4294901760
    %v1338 = vsub.f32 %v96, %v1337
    %1339 = vmatpush.msra.mxu0 %v1338
    %v1340 = vand.u32 %v62, 4294901760
    %v1341 = vsub.f32 %v62, %v1340
    %1342 = vmatmul.f32.gmra.mxu0 %v1341
    %v1343 = vpop.f32.mrf.mxu0
    %v1344 = vadd.f32 %v1290, %v1343
    %1345 = vdwg.mxu0
    %v1346 = vand.u32 %v126, 4294901760
    %1347 = vmatpush.msra.mxu0 %v1346
    %v1348 = vand.u32 %v124, 4294901760
    %1349 = vmatpush.msra.mxu0 %v1348
    %v1350 = vand.u32 %v122, 4294901760
    %1351 = vmatpush.msra.mxu0 %v1350
    %v1352 = vand.u32 %v120, 4294901760
    %1353 = vmatpush.msra.mxu0 %v1352
    %v1354 = vand.u32 %v118, 4294901760
    %1355 = vmatpush.msra.mxu0 %v1354
    %v1356 = vand.u32 %v116, 4294901760
    %1357 = vmatpush.msra.mxu0 %v1356
    %v1358 = vand.u32 %v114, 4294901760
    %1359 = vmatpush.msra.mxu0 %v1358
    %v1360 = vand.u32 %v112, 4294901760
    %1361 = vmatpush.msra.mxu0 %v1360
    %v1362 = vand.u32 %v110, 4294901760
    %1363 = vmatpush.msra.mxu0 %v1362
    %v1364 = vand.u32 %v108, 4294901760
    %1365 = vmatpush.msra.mxu0 %v1364
    %v1366 = vand.u32 %v106, 4294901760
    %1367 = vmatpush.msra.mxu0 %v1366
    %v1368 = vand.u32 %v104, 4294901760
    %1369 = vmatpush.msra.mxu0 %v1368
    %v1370 = vand.u32 %v102, 4294901760
    %1371 = vmatpush.msra.mxu0 %v1370
    %v1372 = vand.u32 %v100, 4294901760
    %1373 = vmatpush.msra.mxu0 %v1372
    %v1374 = vand.u32 %v98, 4294901760
    %1375 = vmatpush.msra.mxu0 %v1374
    %v1376 = vand.u32 %v96, 4294901760
    %1377 = vmatpush.msra.mxu0 %v1376
    %v1378 = vand.u32 %v62, 4294901760
    %v1379 = vsub.f32 %v62, %v1378
    %v1380 = vand.u32 %v1379, 4294901760
    %1381 = vmatmul.f32.gmra.mxu0 %v1380
    %v1382 = vpop.f32.mrf.mxu0
    %v1383 = vadd.f32 %v1344, %v1382
    %1384 = vdwg.mxu0
    %v1385 = vand.u32 %v126, 4294901760
    %v1386 = vsub.f32 %v126, %v1385
    %v1387 = vand.u32 %v1386, 4294901760
    %1388 = vmatpush.msra.mxu0 %v1387
    %v1389 = vand.u32 %v124, 4294901760
    %v1390 = vsub.f32 %v124, %v1389
    %v1391 = vand.u32 %v1390, 4294901760
    %1392 = vmatpush.msra.mxu0 %v1391
    %v1393 = vand.u32 %v122, 4294901760
    %v1394 = vsub.f32 %v122, %v1393
    %v1395 = vand.u32 %v1394, 4294901760
    %1396 = vmatpush.msra.mxu0 %v1395
    %v1397 = vand.u32 %v120, 4294901760
    %v1398 = vsub.f32 %v120, %v1397
    %v1399 = vand.u32 %v1398, 4294901760
    %1400 = vmatpush.msra.mxu0 %v1399
    %v1401 = vand.u32 %v118, 4294901760
    %v1402 = vsub.f32 %v118, %v1401
    %v1403 = vand.u32 %v1402, 4294901760
    %1404 = vmatpush.msra.mxu0 %v1403
    %v1405 = vand.u32 %v116, 4294901760
    %v1406 = vsub.f32 %v116, %v1405
    %v1407 = vand.u32 %v1406, 4294901760
    %1408 = vmatpush.msra.mxu0 %v1407
    %v1409 = vand.u32 %v114, 4294901760
    %v1410 = vsub.f32 %v114, %v1409
    %v1411 = vand.u32 %v1410, 4294901760
    %1412 = vmatpush.msra.mxu0 %v1411
    %v1413 = vand.u32 %v112, 4294901760
    %v1414 = vsub.f32 %v112, %v1413
    %v1415 = vand.u32 %v1414, 4294901760
    %1416 = vmatpush.msra.mxu0 %v1415
    %v1417 = vand.u32 %v110, 4294901760
    %v1418 = vsub.f32 %v110, %v1417
    %v1419 = vand.u32 %v1418, 4294901760
    %1420 = vmatpush.msra.mxu0 %v1419
    %v1421 = vand.u32 %v108, 4294901760
    %v1422 = vsub.f32 %v108, %v1421
    %v1423 = vand.u32 %v1422, 4294901760
    %1424 = vmatpush.msra.mxu0 %v1423
    %v1425 = vand.u32 %v106, 4294901760
    %v1426 = vsub.f32 %v106, %v1425
    %v1427 = vand.u32 %v1426, 4294901760
    %1428 = vmatpush.msra.mxu0 %v1427
    %v1429 = vand.u32 %v104, 4294901760
    %v1430 = vsub.f32 %v104, %v1429
    %v1431 = vand.u32 %v1430, 4294901760
    %1432 = vmatpush.msra.mxu0 %v1431
    %v1433 = vand.u32 %v102, 4294901760
    %v1434 = vsub.f32 %v102, %v1433
    %v1435 = vand.u32 %v1434, 4294901760
    %1436 = vmatpush.msra.mxu0 %v1435
    %v1437 = vand.u32 %v100, 4294901760
    %v1438 = vsub.f32 %v100, %v1437
    %v1439 = vand.u32 %v1438, 4294901760
    %1440 = vmatpush.msra.mxu0 %v1439
    %v1441 = vand.u32 %v98, 4294901760
    %v1442 = vsub.f32 %v98, %v1441
    %v1443 = vand.u32 %v1442, 4294901760
    %1444 = vmatpush.msra.mxu0 %v1443
    %v1445 = vand.u32 %v96, 4294901760
    %v1446 = vsub.f32 %v96, %v1445
    %v1447 = vand.u32 %v1446, 4294901760
    %1448 = vmatpush.msra.mxu0 %v1447
    %v1449 = vand.u32 %v62, 4294901760
    %1450 = vmatmul.f32.gmra.mxu0 %v1449
    %v1451 = vpop.f32.mrf.mxu0
    %v1452 = vadd.f32 %v1383, %v1451
    %1453 = vdwg.mxu0
    %v1454 = vand.u32 %v126, 4294901760
    %1455 = vmatpush.msra.mxu0 %v1454
    %v1456 = vand.u32 %v124, 4294901760
    %1457 = vmatpush.msra.mxu0 %v1456
    %v1458 = vand.u32 %v122, 4294901760
    %1459 = vmatpush.msra.mxu0 %v1458
    %v1460 = vand.u32 %v120, 4294901760
    %1461 = vmatpush.msra.mxu0 %v1460
    %v1462 = vand.u32 %v118, 4294901760
    %1463 = vmatpush.msra.mxu0 %v1462
    %v1464 = vand.u32 %v116, 4294901760
    %1465 = vmatpush.msra.mxu0 %v1464
    %v1466 = vand.u32 %v114, 4294901760
    %1467 = vmatpush.msra.mxu0 %v1466
    %v1468 = vand.u32 %v112, 4294901760
    %1469 = vmatpush.msra.mxu0 %v1468
    %v1470 = vand.u32 %v110, 4294901760
    %1471 = vmatpush.msra.mxu0 %v1470
    %v1472 = vand.u32 %v108, 4294901760
    %1473 = vmatpush.msra.mxu0 %v1472
    %v1474 = vand.u32 %v106, 4294901760
    %1475 = vmatpush.msra.mxu0 %v1474
    %v1476 = vand.u32 %v104, 4294901760
    %1477 = vmatpush.msra.mxu0 %v1476
    %v1478 = vand.u32 %v102, 4294901760
    %1479 = vmatpush.msra.mxu0 %v1478
    %v1480 = vand.u32 %v100, 4294901760
    %1481 = vmatpush.msra.mxu0 %v1480
    %v1482 = vand.u32 %v98, 4294901760
    %1483 = vmatpush.msra.mxu0 %v1482
    %v1484 = vand.u32 %v96, 4294901760
    %1485 = vmatpush.msra.mxu0 %v1484
    %v1486 = vand.u32 %v62, 4294901760
    %1487 = vmatmul.f32.gmra.mxu0 %v1486
    %v1488 = vpop.f32.mrf.mxu0
    %v1489 = vadd.f32 %v1452, %v1488
    %1490 = vdwg.mxu0
    %v1491 = vmul.f32 %v807, %v807
    %v1492 = vsub.f32 %v1489, %v1491
    %v1493 = vmax.f32 %v1492, 0.0
    %v1494 = vsub.f32 %v61, %v807
    %v1495 = vadd.f32 %v1493, 1e-12
    %v1496 = vrsqrt.pop %v1495
    %v1497 = vmul.f32 %v1496, %v1495
    %v1498 = vmul.f32 %v1497, %v1496
    %v1499 = vmul.f32 0.5, %v1498
    %v1500 = vsub.f32 1.5, %v1499
    %v1501 = vmul.f32 %v1496, %v1500
    %vm1502 = vweird.f32 %v1495
    %vm1503 = vweird.f32 %v1496
    %vm1504 = vmor %vm1502, %vm1503
    %v1505 = vsel %vm1504, %v1496, %v1501
    %v1506 = vmul.f32 %v1494, %v1505
    %v1507 = vld [vmem:[#allocation5] sm:$0x1]
    %v1509 = vperm.slane %v1507, 0
    %v1511 = vmul.f32 %v1509, %v1506
    %v1512 = vld [vmem:[%s2] sm:$0x1]
    %v1514 = vperm.slane %v1512, 0
    %v1516 = vadd.f32 %v1511, %v1514
    %1517 = vst [vmem:[#allocation8] sm:$0xf] %v1516
    // Predicated region
    $region30: #{tpu_custom_call.1} parent=1 // pred_check
      _
    $region31: #{tpu_custom_call.1} parent=1 // pred_check_branch
      %1519 = sbr.rel (0) target = $region33
    $region32: #{tpu_custom_call.1} parent=1 // pred_region
      %1521 = vsyncadd [#allocation4], 0
      %s1523 = sshll.u32 [#allocation8], 4
      %s1524 = int_to_ptr.vmem [resolvable:$true] %s1523
      %s1525 = sshll.u32 %s4, 4
      %s1526 = int_to_ptr.hbm [resolvable:$true] %s1525
      %1528 = dma.vmem_to_hbm [thread:$0]  %s1524, 64, %s1526, [#allocation4]
    $region33: #{tpu_custom_call.1} parent=1 // pred_fallthru
      _
    // Predicated region
    $region34: #{tpu_custom_call.1} parent=1 // pred_check
      _
    $region35: #{tpu_custom_call.1} parent=1 // pred_check_branch
      %1530 = sbr.rel (0) target = $region37
    $region36: #{tpu_custom_call.1} parent=1 // pred_region
      %1532 = dma.done [#allocation4], 64
    $region37: #{tpu_custom_call.1} parent=1 // pred_fallthru
      _
    %1533 = vsyncpa [#allocation3], 1
    %1534 = vsyncpa [#allocation6], 1
    %1535 = vsyncpa [#allocation4], 1

</llo_original>
